<compile_context>
chip_gen: v6e
topology: v6e:2x2x1
jax: 0.10.0
libtpu: 0.0.40
codegen_flags: <defaults>
</compile_context>

<pallas_src>
import numpy as np
import jax
import jax.numpy as jnp
from jax.experimental import pallas as pl
from jax.experimental.pallas import tpu as pltpu

EPS = 1e-5          # PyTorch BatchNorm1d default eps
TILE_N = 256        # rows (words) per grid step
NEG_BIAS = -30.0    # bias for non-existent windows -> tanh == -1 (max-neutral)


# ----------------------------------------------------------------------------
# Parameter preparation (host-side, once)
# ----------------------------------------------------------------------------
def _build_fused_conv_params(conv_ws, conv_bs, Lc, E, P):
    """Block-banded fused conv weight/bias.

    Returns W [Lc*E, n_win_max*P], b [1, n_win_max*P], n_win_max.
    Column group j (128 lanes) holds window-j pre-activations for all convs
    laid out as [F0 | F1 | ... | zero pad].
    """
    n_win_max = max(Lc - int(w.shape[0]) + 1 for w in conv_ws)
    K = Lc * E
    W = np.zeros((K, n_win_max * P), np.float32)
    b = np.zeros((1, n_win_max * P), np.float32)
    col = 0
    for w_i, b_i in zip(conv_ws, conv_bs):
        w_np = np.asarray(w_i, np.float32)            # [fs, E, Fi]
        b_np = np.asarray(b_i, np.float32).reshape(-1)
        fs, _, Fi = w_np.shape
        n_win = Lc - fs + 1
        w_flat = w_np.reshape(fs * E, Fi)
        for j in range(n_win_max):
            c0 = j * P + col
            if j < n_win:
                W[j * E:(j + fs) * E, c0:c0 + Fi] = w_flat
                b[0, c0:c0 + Fi] = b_np
            else:
                b[0, c0:c0 + Fi] = NEG_BIAS           # tanh -> -1, max-neutral
        col += Fi
    return jnp.asarray(W), jnp.asarray(b), n_win_max


# ----------------------------------------------------------------------------
# Kernel A: fused char-conv + tanh + max-pool + partial batch stats
# ----------------------------------------------------------------------------
def _make_conv_kernel(n_real, tile_n, n_win_max, P):
    def kernel(emb_ref, w_ref, b_ref, feats_ref, stats_ref):
        x = emb_ref[...]                               # [tile_n, Lc*E] bf16
        w = w_ref[...]                                 # [Lc*E, n_win_max*P] bf16
        pre = jnp.dot(x, w, preferred_element_type=jnp.float32) + b_ref[...]
        act = jnp.tanh(pre)                            # f32
        # Max over window groups: 128-aligned lane slices, pure VPU maxes.
        feats = act[:, 0:P]
        for j in range(1, n_win_max):
            feats = jnp.maximum(feats, act[:, j * P:(j + 1) * P])
        feats_ref[...] = feats                         # lane-dense [tile_n, P]

        # Masked partial batch statistics (exclude zero-padded rows).
        row = (pl.program_id(0) * tile_n
               + jax.lax.broadcasted_iota(jnp.int32, (tile_n, 1), 0))
        masked = jnp.where(row < n_real, feats, 0.0)
        s = jnp.sum(masked, axis=0, keepdims=True)             # [1, P]
        sq = jnp.sum(masked * masked, axis=0, keepdims=True)   # [1, P]
        stats_ref[...] = jnp.concatenate(
            [s, sq, jnp.zeros((6, P), jnp.float32)], axis=0)   # [8, P]
    return kernel


# ----------------------------------------------------------------------------
# Kernel B: BatchNorm (batch stats) + Highway x2
# ----------------------------------------------------------------------------
def _make_bn_highway_kernel():
    def kernel(feats_ref, mean_ref, inv_ref,
               w11_ref, b11_ref, w12_ref, b12_ref,
               w21_ref, b21_ref, w22_ref, b22_ref, out_ref):
        h = (feats_ref[...] - mean_ref[...]) * inv_ref[...]     # f32 [tile_n, P]

        def highway(h, wt_ref, bt_ref, wg_ref, bg_ref):
            t = jax.nn.sigmoid(
                jnp.dot(h, wt_ref[...], preferred_element_type=jnp.float32)
                + bt_ref[...])
            g = jnp.maximum(
                jnp.dot(h, wg_ref[...], preferred_element_type=jnp.float32)
                + bg_ref[...], 0.0)
            return t * g + (1.0 - t) * h

        h = highway(h, w11_ref, b11_ref, w12_ref, b12_ref)
        h = highway(h, w21_ref, b21_ref, w22_ref, b22_ref)
        out_ref[...] = h
    return kernel


# ----------------------------------------------------------------------------
# Forward wrapper
# ----------------------------------------------------------------------------
def cnnchar_forward(ids, emb_table, conv_ws, conv_bs, hw_params, B, M, Lc):
    N = B * M
    E = int(emb_table.shape[-1])
    D = sum(int(w.shape[-1]) for w in conv_ws)
    P = max(128, ((D + 127) // 128) * 128)          # lane-dense feature width
    K = Lc * E

    W_conv, b_conv, n_win_max = _build_fused_conv_params(conv_ws, conv_bs, Lc, E, P)
    Wc = n_win_max * P

    # Zero-pad highway params to lane-dense [P, P] / [1, P].
    hw_pad = []
    for idx in range(0, 8, 2):
        w = jnp.zeros((P, P), jnp.float32).at[:D, :D].set(hw_params[idx])
        b = jnp.zeros((1, P), jnp.float32).at[:, :D].set(hw_params[idx + 1])
        hw_pad.extend([w, b])

    # Embedding gather (plain JAX glue), flatten, cast bf16, pad N to TILE_N.
    # TODO(synk): fuse the embedding gather into kernel A (scalar-prefetch ids
    # + VMEM-resident table) so the [N, Lc*E] intermediate never round-trips HBM.
    tile_n = TILE_N
    n_pad = ((N + tile_n - 1) // tile_n) * tile_n
    n_tiles = n_pad // tile_n
    emb = emb_table.astype(jnp.bfloat16)[ids.reshape(N, Lc)]      # [N, Lc, E]
    emb_flat = jnp.pad(emb.reshape(N, K), ((0, n_pad - N), (0, 0)))

    parallel = pltpu.CompilerParams(dimension_semantics=("parallel",))

    # --- kernel A ---
    conv_kernel = _make_conv_kernel(N, tile_n, n_win_max, P)
    feats, stats = pl.pallas_call(
        conv_kernel,
        out_shape=(jax.ShapeDtypeStruct((n_pad, P), jnp.float32),
                   jax.ShapeDtypeStruct((n_tiles * 8, P), jnp.float32)),
        grid=(n_tiles,),
        in_specs=[pl.BlockSpec((tile_n, K), lambda i: (i, 0)),
                  pl.BlockSpec((K, Wc), lambda i: (0, 0)),
                  pl.BlockSpec((1, Wc), lambda i: (0, 0))],
        out_specs=(pl.BlockSpec((tile_n, P), lambda i: (i, 0)),
                   pl.BlockSpec((8, P), lambda i: (i, 0))),
        compiler_params=parallel,
    )(emb_flat, W_conv.astype(jnp.bfloat16), b_conv)

    # --- tiny glue: per-tile partials -> batch mean / inv-std (biased var) ---
    stats = stats.reshape(n_tiles, 8, P)
    total = jnp.sum(stats[:, 0, :], axis=0)
    total_sq = jnp.sum(stats[:, 1, :], axis=0)
    mean = total / N
    var = jnp.maximum(total_sq / N - mean * mean, 0.0)
    invstd = jax.lax.rsqrt(var + EPS)
    mean = mean.reshape(1, P)
    invstd = invstd.reshape(1, P)

    # --- kernel B ---  (dropout is identity in eval mode)
    bn_kernel = _make_bn_highway_kernel()
    row_spec = pl.BlockSpec((tile_n, P), lambda i: (i, 0))
    vec_spec = pl.BlockSpec((1, P), lambda i: (0, 0))
    mat_spec = pl.BlockSpec((P, P), lambda i: (0, 0))
    out = pl.pallas_call(
        bn_kernel,
        out_shape=jax.ShapeDtypeStruct((n_pad, P), jnp.float32),
        grid=(n_tiles,),
        in_specs=[row_spec, vec_spec, vec_spec,
                  mat_spec, vec_spec, mat_spec, vec_spec,
                  mat_spec, vec_spec, mat_spec, vec_spec],
        out_specs=row_spec,
        compiler_params=parallel,
    )(feats, mean, invstd, *hw_pad)

    return out[:N, :D].reshape(B, M, D)


# ----------------------------------------------------------------------------
# Parameter init (mirrors the PyTorch init) and pure-JAX reference
# ----------------------------------------------------------------------------
def init_params(key, n_ch_tokens, E, conv_filter_nums, conv_filter_sizes, pad_idx=0):
    keys = jax.random.split(key, 16)
    initrange = 0.5 / E
    emb = jax.random.uniform(keys[0], (n_ch_tokens, E), jnp.float32,
                             -initrange, initrange)
    emb = emb.at[pad_idx].set(0.0)
    conv_ws, conv_bs = [], []
    for i, (fn, fs) in enumerate(zip(conv_filter_nums, conv_filter_sizes)):
        fan_in, fan_out = fs * E, fn
        limit = (6.0 / (fan_in + fan_out)) ** 0.5       # xavier_uniform
        w = jax.random.uniform(keys[1 + i], (fs, E, fn), jnp.float32, -limit, limit)
        conv_ws.append(w)
        conv_bs.append(jnp.zeros((1, fn), jnp.float32))
    D = sum(conv_filter_nums)
    hw = []
    kidx = 5
    for _ in range(2):          # highway1, highway2
        for _ in range(2):      # fc1, fc2
            std = (2.0 / (D + D)) ** 0.5                # xavier_normal
            w = std * jax.random.normal(keys[kidx], (D, D), jnp.float32)
            kidx += 1
            hw.extend([w, jnp.zeros((1, D), jnp.float32)])
    return emb, conv_ws, conv_bs, hw


def reference(ids, emb_table, conv_ws, conv_bs, hw, B, M, Lc):
    """Pure-JAX reference of the same forward pass.

    The conv-stage matmul inputs (embedding table, conv weights) are rounded
    to bf16 to mirror the kernel's mixed precision (accumulation stays f32).
    """
    N = B * M
    table = emb_table.astype(jnp.bfloat16).astype(jnp.float32)
    x = table[ids.reshape(N, Lc)]
    feats = []
    for w, b in zip(conv_ws, conv_bs):
        wq = w.astype(jnp.bfloat16).astype(jnp.float32)
        fs = w.shape[0]
        pooled = None
        for j in range(Lc - fs + 1):
            s = b
            for dj in range(fs):
                s = s + x[:, j + dj, :] @ wq[dj]
            a = jnp.tanh(s)
            pooled = a if pooled is None else jnp.maximum(pooled, a)
        feats.append(pooled)
    h = jnp.concatenate(feats, axis=-1)
    mean = h.mean(0, keepdims=True)
    var = ((h - mean) ** 2).mean(0, keepdims=True)
    h = (h - mean) / jnp.sqrt(var + EPS)
    for i in range(2):
        w1, b1, w2, b2 = hw[4 * i:4 * i + 4]
        t = jax.nn.sigmoid(h @ w1 + b1)
        h = t * jnp.maximum(h @ w2 + b2, 0.0) + (1.0 - t) * h
    return h.reshape(B, M, -1)


if __name__ == "__main__":
    # Small shapes consistent with the module: inputs [bs, max_len, max_len_char]
    B, M, Lc = 2, 8, 8
    E = 16                      # ch_emb_size
    n_ch_tokens = 50
    conv_filter_nums = [8, 16]
    conv_filter_sizes = [2, 3]

    key = jax.random.PRNGKey(0)
    k_ids, k_params = jax.random.split(key)
    ids = jax.random.randint(k_ids, (B, M, Lc), 0, n_ch_tokens, dtype=jnp.int32)
    emb_table, conv_ws, conv_bs, hw = init_params(
        k_params, n_ch_tokens, E, conv_filter_nums, conv_filter_sizes)

    out = cnnchar_forward(ids, emb_table, conv_ws, conv_bs, hw, B, M, Lc)
    out = jax.block_until_ready(out)

    ref = reference(ids, emb_table, conv_ws, conv_bs, hw, B, M, Lc)
    assert out.shape == (B, M, sum(conv_filter_nums))
    max_err = float(jnp.max(jnp.abs(out - ref)))
    assert jnp.allclose(out, ref, atol=1e-3, rtol=1e-3), \
        f"mismatch vs reference, max abs err {max_err}"
    # TODO(synk): dropout is identity (eval mode); training-mode RNG dropout not implemented.
    print("KERNEL_OK")
</pallas_src>

<mosaic_0001>
module attributes {stable_mosaic.version = 11 : i64} {
  func.func @kernel(%arg0: i32, %arg1: memref<256x128xbf16, #tpu.memory_space<vmem>>, %arg2: memref<128x896xbf16, #tpu.memory_space<vmem>>, %arg3: memref<1x896xf32, #tpu.memory_space<vmem>>, %arg4: memref<256x128xf32, #tpu.memory_space<vmem>>, %arg5: memref<8x128xf32, #tpu.memory_space<vmem>>) attributes {dimension_semantics = [#tpu.dimension_semantics<parallel>], iteration_bounds = array<i64: 1>, scalar_prefetch = 0 : i64, scratch_operands = 0 : i64, tpu.core_type = #tpu.core_type<tc>, window_params = [{transform_indices = @transform_0, window_bounds = array<i64: 256, 128>}, {pipeline_mode = #tpu.pipeline_mode<synchronous>, transform_indices = @transform_1, window_bounds = array<i64: 128, 896>}, {pipeline_mode = #tpu.pipeline_mode<synchronous>, transform_indices = @transform_2, window_bounds = array<i64: 1, 896>}, {transform_indices = @transform_3, window_bounds = array<i64: 256, 128>}, {transform_indices = @transform_4, window_bounds = array<i64: 8, 128>}]} {
    %c0 = arith.constant 0 : index
    %c0_0 = arith.constant 0 : index
    %0 = vector.load %arg1[%c0, %c0_0] : memref<256x128xbf16, #tpu.memory_space<vmem>>, vector<256x128xbf16>
    %c0_1 = arith.constant 0 : index
    %c0_2 = arith.constant 0 : index
    %1 = vector.load %arg2[%c0_1, %c0_2] : memref<128x896xbf16, #tpu.memory_space<vmem>>, vector<128x896xbf16>
    %cst = arith.constant dense<0.000000e+00> : vector<256x896xf32>
    %2 = tpu.matmul %0, %1, %cst {dimension_numbers = #tpu.dot_dimension_numbers<[1], [0], [0], [1], [0, 0, 1, 1], [], []>} : vector<256x128xbf16>, vector<128x896xbf16>, vector<256x896xf32> -> vector<256x896xf32>
    %c0_3 = arith.constant 0 : index
    %c0_4 = arith.constant 0 : index
    %3 = vector.load %arg3[%c0_3, %c0_4] : memref<1x896xf32, #tpu.memory_space<vmem>>, vector<1x896xf32>
    %4 = vector.broadcast %3 : vector<1x896xf32> to vector<256x896xf32>
    %5 = arith.addf %2, %4 : vector<256x896xf32>
    %6 = math.tanh %5 : vector<256x896xf32>
    %7 = vector.extract_strided_slice %6 {offsets = [0, 0], sizes = [256, 128], strides = [1, 1]} : vector<256x896xf32> to vector<256x128xf32>
    %8 = vector.extract_strided_slice %6 {offsets = [0, 128], sizes = [256, 128], strides = [1, 1]} : vector<256x896xf32> to vector<256x128xf32>
    %9 = arith.maximumf %7, %8 : vector<256x128xf32>
    %10 = vector.extract_strided_slice %6 {offsets = [0, 256], sizes = [256, 128], strides = [1, 1]} : vector<256x896xf32> to vector<256x128xf32>
    %11 = arith.maximumf %9, %10 : vector<256x128xf32>
    %12 = vector.extract_strided_slice %6 {offsets = [0, 384], sizes = [256, 128], strides = [1, 1]} : vector<256x896xf32> to vector<256x128xf32>
    %13 = arith.maximumf %11, %12 : vector<256x128xf32>
    %14 = vector.extract_strided_slice %6 {offsets = [0, 512], sizes = [256, 128], strides = [1, 1]} : vector<256x896xf32> to vector<256x128xf32>
    %15 = arith.maximumf %13, %14 : vector<256x128xf32>
    %16 = vector.extract_strided_slice %6 {offsets = [0, 640], sizes = [256, 128], strides = [1, 1]} : vector<256x896xf32> to vector<256x128xf32>
    %17 = arith.maximumf %15, %16 : vector<256x128xf32>
    %18 = vector.extract_strided_slice %6 {offsets = [0, 768], sizes = [256, 128], strides = [1, 1]} : vector<256x896xf32> to vector<256x128xf32>
    %19 = arith.maximumf %17, %18 : vector<256x128xf32>
    %c0_5 = arith.constant 0 : index
    %c0_6 = arith.constant 0 : index
    %20 = vector.load %arg4[%c0_5, %c0_6] : memref<256x128xf32, #tpu.memory_space<vmem>>, vector<256x128xf32>
    tpu.vector_store %arg4[%c0_5, %c0_6], %19 {strides = array<i32>} : memref<256x128xf32, #tpu.memory_space<vmem>>, vector<256x128xf32>,
    %c256_i32 = arith.constant 256 : i32
    %21 = arith.muli %arg0, %c256_i32 : i32
    %22 = tpu.iota {dimensions = array<i32: 0>} : vector<256x1xi32>
    %23 = vector.broadcast %21 : i32 to vector<256x1xi32>
    %24 = arith.addi %23, %22 : vector<256x1xi32>
    %c16_i32 = arith.constant 16 : i32
    %25 = vector.broadcast %c16_i32 : i32 to vector<256x1xi32>
    %26 = arith.cmpi slt, %24, %25 : vector<256x1xi32>
    %cst_7 = arith.constant 0.000000e+00 : f32
    %27 = vector.shape_cast %26 : vector<256x1xi1> to vector<256x1xi1>
    %28 = vector.broadcast %27 : vector<256x1xi1> to vector<256x128xi1>
    %29 = vector.broadcast %cst_7 : f32 to vector<256x128xf32>
    %30 = arith.select %28, %19, %29 : vector<256x128xi1>, vector<256x128xf32>
    %cst_8 = arith.constant dense<0.000000e+00> : vector<128xf32>
    %31 = vector.multi_reduction <add>, %30, %cst_8 [0] : vector<256x128xf32> to vector<128xf32>
    %32 = vector.shape_cast %31 : vector<128xf32> to vector<1x128xf32>
    %33 = arith.mulf %30, %30 : vector<256x128xf32>
    %cst_9 = arith.constant dense<0.000000e+00> : vector<128xf32>
    %34 = vector.multi_reduction <add>, %33, %cst_9 [0] : vector<256x128xf32> to vector<128xf32>
    %35 = vector.shape_cast %34 : vector<128xf32> to vector<1x128xf32>
    %cst_10 = arith.constant 0.000000e+00 : f32
    %36 = vector.broadcast %cst_10 : f32 to vector<6x128xf32>
    %37 = tpu.concatenate %32, %35, %36 in 0 : vector<1x128xf32>, vector<1x128xf32>, vector<6x128xf32> -> vector<8x128xf32>
    %c0_11 = arith.constant 0 : index
    %c0_12 = arith.constant 0 : index
    %38 = vector.load %arg5[%c0_11, %c0_12] : memref<8x128xf32, #tpu.memory_space<vmem>>, vector<8x128xf32>
    tpu.vector_store %arg5[%c0_11, %c0_12], %37 {strides = array<i32>} : memref<8x128xf32, #tpu.memory_space<vmem>>, vector<8x128xf32>,
    return
  }
  func.func @transform_0(%arg0: i32) -> (i32, i32) {
    %c0_i32 = arith.constant 0 : i32
    %c0_i32_0 = arith.constant 0 : i32
    return %arg0, %c0_i32 : i32, i32
  }
  func.func @transform_1(%arg0: i32) -> (i32, i32) {
    %c0_i32 = arith.constant 0 : i32
    %c0_i32_0 = arith.constant 0 : i32
    %c0_i32_1 = arith.constant 0 : i32
    return %c0_i32, %c0_i32_0 : i32, i32
  }
  func.func @transform_2(%arg0: i32) -> (i32, i32) {
    %c0_i32 = arith.constant 0 : i32
    %c0_i32_0 = arith.constant 0 : i32
    %c0_i32_1 = arith.constant 0 : i32
    return %c0_i32, %c0_i32_0 : i32, i32
  }
  func.func @transform_3(%arg0: i32) -> (i32, i32) {
    %c0_i32 = arith.constant 0 : i32
    %c0_i32_0 = arith.constant 0 : i32
    return %arg0, %c0_i32 : i32, i32
  }
  func.func @transform_4(%arg0: i32) -> (i32, i32) {
    %c0_i32 = arith.constant 0 : i32
    %c0_i32_0 = arith.constant 0 : i32
    return %arg0, %c0_i32 : i32, i32
  }
}

</mosaic_0001>

<llo_original>
// kernel: tpu_custom_call.1
$region0: #{tpu_custom_call.1}
  #allocation0 [shape = 'u32[]', space=smem, size = 0x4, offset = 0x4, fixed_abs, tag = 'smem constant byte address 0x4 - core index']
  #allocation1 [shape = 'u32[144,128]{1,0:T(1,128)}', space=vmem, size = 0x12000, scoped, tag = 'internal scratch']
  %s0 = inlined_call_operand.hbm [shape: bf16[256,128], index: 0, kind: input, shape index: {}]
  %s1 = inlined_call_operand.hbm [shape: bf16[128,896], index: 1, kind: input, shape index: {}]
  %s2 = inlined_call_operand.hbm [shape: f32[1,896], index: 2, kind: input, shape index: {}]
  %s3 = inlined_call_operand.hbm [shape: f32[256,128], index: 3, kind: output, shape index: {0}]
  %s4 = inlined_call_operand.hbm [shape: f32[8,128], index: 4, kind: output, shape index: {1}]
  %5 = xla_tuple %s3, %s4
  %s6 = sld [smem:[#allocation0]]
  $region42: #{tpu_custom_call.1} parent=0
    _
  %s8 = ssub.s32 1, %s6
  %s9 = scalar_select 0, %s8, %s6
  $region1: #{tpu_custom_call.1} parent=0
    #allocation2 [shape = 'u8[65536]{0}', space=vmem, size = 0x10000, scoped, tag = 'input window, operand 0, single buffered']
    #allocation3 [shape = 's32[1]{0}', space=sflag, size = 0x4, scoped, tag = 'scoped memory for tpu_custom_call.1']
    #allocation4 [shape = 's32[1]{0}', space=sflag, size = 0x4, scoped, tag = 'scoped memory for tpu_custom_call.1']
    #allocation5 [shape = 'u8[229376]{0}', space=vmem, size = 0x38000, scoped, tag = 'input window, operand 1, single buffered']
    #allocation6 [shape = 's32[1]{0}', space=sflag, size = 0x4, scoped, tag = 'scoped memory for tpu_custom_call.1']
    #allocation7 [shape = 'u8[3584]{0}', space=vmem, size = 0x1000, scoped, tag = 'input window, operand 2, single buffered']
    #allocation8 [shape = 'u8[131072]{0}', space=vmem, size = 0x20000, scoped, tag = 'output window, operand 0, single buffered']
    #allocation9 [shape = 'u8[4096]{0}', space=vmem, size = 0x1000, scoped, tag = 'output window, operand 1, single buffered']
    #allocation10 [shape = 's32[1]{0}', space=sflag, size = 0x4, scoped, tag = 'scoped memory for tpu_custom_call.1']
    %10 = vsyncpa [#allocation3], 0
    %11 = vsyncpa [#allocation6], 0
    %12 = vsyncpa [#allocation4], 0
    %13 = vsyncpa [#allocation10], 0
    // Predicated region
    $region2: #{tpu_custom_call.1} parent=1 // pred_check
      _
    $region3: #{tpu_custom_call.1} parent=1 // pred_check_branch
      %15 = sbr.rel (0) target = $region5
    $region4: #{tpu_custom_call.1} parent=1 // pred_region
      %s17 = ssub.s32 2048, 2048
      %18 = vsyncadd [#allocation3], %s17
      %s19 = sshll.u32 [#allocation2], 4
      %s20 = int_to_ptr.vmem [resolvable:$true] %s19
      %25 = dma.hbm_to_vmem [thread:$0]  %s0, 2048, %s20, [#allocation3], 64, 64, 4
    $region5: #{tpu_custom_call.1} parent=1 // pred_fallthru
      _
    // Predicated region
    $region6: #{tpu_custom_call.1} parent=1 // pred_check
      _
    $region7: #{tpu_custom_call.1} parent=1 // pred_check_branch
      %27 = sbr.rel (0) target = $region9
    $region8: #{tpu_custom_call.1} parent=1 // pred_region
      %s29 = ssub.s32 7168, 7168
      %30 = vsyncadd [#allocation6], %s29
      %s31 = sshll.u32 [#allocation5], 4
      %s32 = int_to_ptr.vmem [resolvable:$true] %s31
      %37 = dma.hbm_to_vmem [thread:$0]  %s1, 7168, %s32, [#allocation6], 448, 448, 28
    $region9: #{tpu_custom_call.1} parent=1 // pred_fallthru
      _
    // Predicated region
    $region10: #{tpu_custom_call.1} parent=1 // pred_check
      _
    $region11: #{tpu_custom_call.1} parent=1 // pred_check_branch
      %39 = sbr.rel (0) target = $region13
    $region12: #{tpu_custom_call.1} parent=1 // pred_region
      %s41 = ssub.s32 112, 112
      %42 = vsyncadd [#allocation6], %s41
      %s44 = sshll.u32 [#allocation7], 4
      %s45 = int_to_ptr.vmem [resolvable:$true] %s44
      %47 = dma.hbm_to_vmem [thread:$0]  %s2, 112, %s45, [#allocation6]
    $region13: #{tpu_custom_call.1} parent=1 // pred_fallthru
      _
    // Predicated region
    $region14: #{tpu_custom_call.1} parent=1 // pred_check
      _
    $region15: #{tpu_custom_call.1} parent=1 // pred_check_branch
      %49 = sbr.rel (0) target = $region17
    $region16: #{tpu_custom_call.1} parent=1 // pred_region
      %50 = dma.done [#allocation3], 2048
    $region17: #{tpu_custom_call.1} parent=1 // pred_fallthru
      _
    // Predicated region
    $region18: #{tpu_custom_call.1} parent=1 // pred_check
      _
    $region19: #{tpu_custom_call.1} parent=1 // pred_check_branch
      %52 = sbr.rel (0) target = $region21
    $region20: #{tpu_custom_call.1} parent=1 // pred_region
      %53 = dma.done [#allocation6], 7168
    $region21: #{tpu_custom_call.1} parent=1 // pred_fallthru
      _
    // Predicated region
    $region22: #{tpu_custom_call.1} parent=1 // pred_check
      _
    $region23: #{tpu_custom_call.1} parent=1 // pred_check_branch
      %55 = sbr.rel (0) target = $region25
    $region24: #{tpu_custom_call.1} parent=1 // pred_region
      %56 = dma.done [#allocation6], 112
    $region25: #{tpu_custom_call.1} parent=1 // pred_fallthru
      _
    %v58 = vld [vmem:[#allocation2] sm:$0xf]
    %v59 = vld [vmem:[#allocation2 + $0x4] sm:$0xf]
    %v60 = vld [vmem:[#allocation2 + $0x8] sm:$0xf]
    %v61 = vld [vmem:[#allocation2 + $0xc] sm:$0xf]
    %v62 = vld [vmem:[#allocation2 + $0x10] sm:$0xf]
    %v63 = vld [vmem:[#allocation2 + $0x14] sm:$0xf]
    %v64 = vld [vmem:[#allocation2 + $0x18] sm:$0xf]
    %v65 = vld [vmem:[#allocation2 + $0x1c] sm:$0xf]
    %v66 = vld [vmem:[#allocation2 + $0x20] sm:$0xf]
    %v67 = vld [vmem:[#allocation2 + $0x24] sm:$0xf]
    %v68 = vld [vmem:[#allocation2 + $0x28] sm:$0xf]
    %v69 = vld [vmem:[#allocation2 + $0x2c] sm:$0xf]
    %v70 = vld [vmem:[#allocation2 + $0x30] sm:$0xf]
    %v71 = vld [vmem:[#allocation2 + $0x34] sm:$0xf]
    %v72 = vld [vmem:[#allocation2 + $0x38] sm:$0xf]
    %v73 = vld [vmem:[#allocation2 + $0x3c] sm:$0xf]
    %v74 = vld [vmem:[#allocation2 + $0x40] sm:$0xf]
    %v75 = vld [vmem:[#allocation2 + $0x44] sm:$0xf]
    %v76 = vld [vmem:[#allocation2 + $0x48] sm:$0xf]
    %v77 = vld [vmem:[#allocation2 + $0x4c] sm:$0xf]
    %v78 = vld [vmem:[#allocation2 + $0x50] sm:$0xf]
    %v79 = vld [vmem:[#allocation2 + $0x54] sm:$0xf]
    %v80 = vld [vmem:[#allocation2 + $0x58] sm:$0xf]
    %v81 = vld [vmem:[#allocation2 + $0x5c] sm:$0xf]
    %v82 = vld [vmem:[#allocation2 + $0x60] sm:$0xf]
    %v83 = vld [vmem:[#allocation2 + $0x64] sm:$0xf]
    %v84 = vld [vmem:[#allocation2 + $0x68] sm:$0xf]
    %v85 = vld [vmem:[#allocation2 + $0x6c] sm:$0xf]
    %v86 = vld [vmem:[#allocation2 + $0x70] sm:$0xf]
    %v87 = vld [vmem:[#allocation2 + $0x74] sm:$0xf]
    %v88 = vld [vmem:[#allocation2 + $0x78] sm:$0xf]
    %v89 = vld [vmem:[#allocation2 + $0x7c] sm:$0xf]
    %v90 = vld [vmem:[#allocation5] sm:$0xff]
    %v91 = vld [vmem:[#allocation5 + $0x8] sm:$0xff]
    %v92 = vld [vmem:[#allocation5 + $0x10] sm:$0xff]
    %v93 = vld [vmem:[#allocation5 + $0x18] sm:$0xf]
    %v94 = vld [vmem:[#allocation5 + $0x1c] sm:$0xff]
    %v95 = vld [vmem:[#allocation5 + $0x24] sm:$0xff]
    %v96 = vld [vmem:[#allocation5 + $0x2c] sm:$0xff]
    %v97 = vld [vmem:[#allocation5 + $0x34] sm:$0xf]
    %v98 = vld [vmem:[#allocation5 + $0x38] sm:$0xff]
    %v99 = vld [vmem:[#allocation5 + $0x40] sm:$0xff]
    %v100 = vld [vmem:[#allocation5 + $0x48] sm:$0xff]
    %v101 = vld [vmem:[#allocation5 + $0x50] sm:$0xf]
    %v102 = vld [vmem:[#allocation5 + $0x54] sm:$0xff]
    %v103 = vld [vmem:[#allocation5 + $0x5c] sm:$0xff]
    %v104 = vld [vmem:[#allocation5 + $0x64] sm:$0xff]
    %v105 = vld [vmem:[#allocation5 + $0x6c] sm:$0xf]
    %v106 = vld [vmem:[#allocation5 + $0x70] sm:$0xff]
    %v107 = vld [vmem:[#allocation5 + $0x78] sm:$0xff]
    %v108 = vld [vmem:[#allocation5 + $0x80] sm:$0xff]
    %v109 = vld [vmem:[#allocation5 + $0x88] sm:$0xf]
    %v110 = vld [vmem:[#allocation5 + $0x8c] sm:$0xff]
    %v111 = vld [vmem:[#allocation5 + $0x94] sm:$0xff]
    %v112 = vld [vmem:[#allocation5 + $0x9c] sm:$0xff]
    %v113 = vld [vmem:[#allocation5 + $0xa4] sm:$0xf]
    %v114 = vld [vmem:[#allocation5 + $0xa8] sm:$0xff]
    %v115 = vld [vmem:[#allocation5 + $0xb0] sm:$0xff]
    %v116 = vld [vmem:[#allocation5 + $0xb8] sm:$0xff]
    %v117 = vld [vmem:[#allocation5 + $0xc0] sm:$0xf]
    %v118 = vld [vmem:[#allocation5 + $0xc4] sm:$0xff]
    %v119 = vld [vmem:[#allocation5 + $0xcc] sm:$0xff]
    %v120 = vld [vmem:[#allocation5 + $0xd4] sm:$0xff]
    %v121 = vld [vmem:[#allocation5 + $0xdc] sm:$0xf]
    %v122 = vld [vmem:[#allocation5 + $0xe0] sm:$0xff]
    %v123 = vld [vmem:[#allocation5 + $0xe8] sm:$0xff]
    %v124 = vld [vmem:[#allocation5 + $0xf0] sm:$0xff]
    %v125 = vld [vmem:[#allocation5 + $0xf8] sm:$0xf]
    %v126 = vld [vmem:[#allocation5 + $0xfc] sm:$0xff]
    %v127 = vld [vmem:[#allocation5 + $0x104] sm:$0xff]
    %v128 = vld [vmem:[#allocation5 + $0x10c] sm:$0xff]
    %v129 = vld [vmem:[#allocation5 + $0x114] sm:$0xf]
    %v130 = vld [vmem:[#allocation5 + $0x118] sm:$0xff]
    %v131 = vld [vmem:[#allocation5 + $0x120] sm:$0xff]
    %v132 = vld [vmem:[#allocation5 + $0x128] sm:$0xff]
    %v133 = vld [vmem:[#allocation5 + $0x130] sm:$0xf]
    %v134 = vld [vmem:[#allocation5 + $0x134] sm:$0xff]
    %v135 = vld [vmem:[#allocation5 + $0x13c] sm:$0xff]
    %v136 = vld [vmem:[#allocation5 + $0x144] sm:$0xff]
    %v137 = vld [vmem:[#allocation5 + $0x14c] sm:$0xf]
    %v138 = vld [vmem:[#allocation5 + $0x150] sm:$0xff]
    %v139 = vld [vmem:[#allocation5 + $0x158] sm:$0xff]
    %v140 = vld [vmem:[#allocation5 + $0x160] sm:$0xff]
    %v141 = vld [vmem:[#allocation5 + $0x168] sm:$0xf]
    %v142 = vld [vmem:[#allocation5 + $0x16c] sm:$0xff]
    %v143 = vld [vmem:[#allocation5 + $0x174] sm:$0xff]
    %v144 = vld [vmem:[#allocation5 + $0x17c] sm:$0xff]
    %v145 = vld [vmem:[#allocation5 + $0x184] sm:$0xf]
    %v146 = vld [vmem:[#allocation5 + $0x188] sm:$0xff]
    %v147 = vld [vmem:[#allocation5 + $0x190] sm:$0xff]
    %v148 = vld [vmem:[#allocation5 + $0x198] sm:$0xff]
    %v149 = vld [vmem:[#allocation5 + $0x1a0] sm:$0xf]
    %v150 = vld [vmem:[#allocation5 + $0x1a4] sm:$0xff]
    %v151 = vld [vmem:[#allocation5 + $0x1ac] sm:$0xff]
    %v152 = vld [vmem:[#allocation5 + $0x1b4] sm:$0xff]
    %v153 = vld [vmem:[#allocation5 + $0x1bc] sm:$0xf]
    %v154 = vld [vmem:[#allocation7] sm:$0xff]
    %v156 = vlaneseq
    %v157 = vshrl.u32 %v156, 7
    %v158 = vsub.s32 0, %v157
    %v159 = vrot.slane %v154, %v158
    %v160 = vlaneseq
    %v161 = vshrl.u32 %v160, 7
    %v162 = vsub.s32 1, %v161
    %v163 = vrot.slane %v154, %v162
    %v164 = vlaneseq
    %v165 = vshrl.u32 %v164, 7
    %v166 = vsub.s32 2, %v165
    %v167 = vrot.slane %v154, %v166
    %v168 = vlaneseq
    %v169 = vshrl.u32 %v168, 7
    %v170 = vsub.s32 3, %v169
    %v171 = vrot.slane %v154, %v170
    %v172 = vlaneseq
    %v173 = vshrl.u32 %v172, 7
    %v174 = vsub.s32 4, %v173
    %v175 = vrot.slane %v154, %v174
    %v176 = vlaneseq
    %v177 = vshrl.u32 %v176, 7
    %v178 = vsub.s32 5, %v177
    %v179 = vrot.slane %v154, %v178
    %v180 = vlaneseq
    %v181 = vshrl.u32 %v180, 7
    %v182 = vsub.s32 6, %v181
    %v183 = vrot.slane %v154, %v182
    %v223 = vunpack.c.l.b16 %v58
    %v224 = vunpack.c.l.b16 %v59
    %v225 = vunpack.c.l.b16 %v60
    %v226 = vunpack.c.l.b16 %v61
    %v227 = vunpack.c.l.b16 %v62
    %v228 = vunpack.c.l.b16 %v63
    %v229 = vunpack.c.l.b16 %v64
    %v230 = vunpack.c.l.b16 %v65
    %v231 = vunpack.c.l.b16 %v66
    %v232 = vunpack.c.l.b16 %v67
    %v233 = vunpack.c.l.b16 %v68
    %v234 = vunpack.c.l.b16 %v69
    %v235 = vunpack.c.l.b16 %v70
    %v236 = vunpack.c.l.b16 %v71
    %v237 = vunpack.c.l.b16 %v72
    %v238 = vunpack.c.l.b16 %v73
    %v239 = vunpack.c.l.b16 %v74
    %v240 = vunpack.c.l.b16 %v75
    %v241 = vunpack.c.l.b16 %v76
    %v242 = vunpack.c.l.b16 %v77
    %v243 = vunpack.c.l.b16 %v78
    %v244 = vunpack.c.l.b16 %v79
    %v245 = vunpack.c.l.b16 %v80
    %v246 = vunpack.c.l.b16 %v81
    %v247 = vunpack.c.l.b16 %v82
    %v248 = vunpack.c.l.b16 %v83
    %v249 = vunpack.c.l.b16 %v84
    %v250 = vunpack.c.l.b16 %v85
    %v251 = vunpack.c.l.b16 %v86
    %v252 = vunpack.c.l.b16 %v87
    %v253 = vunpack.c.l.b16 %v88
    %v254 = vunpack.c.l.b16 %v89
    %v255 = vpack.c.b16 %v224, %v223
    %v256 = vpack.c.b16 %v226, %v225
    %v257 = vpack.c.b16 %v228, %v227
    %v258 = vpack.c.b16 %v230, %v229
    %v259 = vpack.c.b16 %v232, %v231
    %v260 = vpack.c.b16 %v234, %v233
    %v261 = vpack.c.b16 %v236, %v235
    %v262 = vpack.c.b16 %v238, %v237
    %v263 = vpack.c.b16 %v240, %v239
    %v264 = vpack.c.b16 %v242, %v241
    %v265 = vpack.c.b16 %v244, %v243
    %v266 = vpack.c.b16 %v246, %v245
    %v267 = vpack.c.b16 %v248, %v247
    %v268 = vpack.c.b16 %v250, %v249
    %v269 = vpack.c.b16 %v252, %v251
    %v270 = vpack.c.b16 %v254, %v253
    %v351 = vunpack.c.l.b16 %v90
    %v352 = vunpack.c.h.b16 %v90
    %v353 = vunpack.c.l.b16 %v91
    %v354 = vunpack.c.h.b16 %v91
    %v355 = vunpack.c.l.b16 %v92
    %v356 = vunpack.c.h.b16 %v92
    %v357 = vunpack.c.l.b16 %v93
    %v358 = vunpack.c.l.b16 %v94
    %v359 = vunpack.c.h.b16 %v94
    %v360 = vunpack.c.l.b16 %v95
    %v361 = vunpack.c.h.b16 %v95
    %v362 = vunpack.c.l.b16 %v96
    %v363 = vunpack.c.h.b16 %v96
    %v364 = vunpack.c.l.b16 %v97
    %v365 = vunpack.c.l.b16 %v98
    %v366 = vunpack.c.h.b16 %v98
    %v367 = vunpack.c.l.b16 %v99
    %v368 = vunpack.c.h.b16 %v99
    %v369 = vunpack.c.l.b16 %v100
    %v370 = vunpack.c.h.b16 %v100
    %v371 = vunpack.c.l.b16 %v101
    %v372 = vunpack.c.l.b16 %v102
    %v373 = vunpack.c.h.b16 %v102
    %v374 = vunpack.c.l.b16 %v103
    %v375 = vunpack.c.h.b16 %v103
    %v376 = vunpack.c.l.b16 %v104
    %v377 = vunpack.c.h.b16 %v104
    %v378 = vunpack.c.l.b16 %v105
    %v379 = vunpack.c.l.b16 %v106
    %v380 = vunpack.c.h.b16 %v106
    %v381 = vunpack.c.l.b16 %v107
    %v382 = vunpack.c.h.b16 %v107
    %v383 = vunpack.c.l.b16 %v108
    %v384 = vunpack.c.h.b16 %v108
    %v385 = vunpack.c.l.b16 %v109
    %v386 = vunpack.c.l.b16 %v110
    %v387 = vunpack.c.h.b16 %v110
    %v388 = vunpack.c.l.b16 %v111
    %v389 = vunpack.c.h.b16 %v111
    %v390 = vunpack.c.l.b16 %v112
    %v391 = vunpack.c.h.b16 %v112
    %v392 = vunpack.c.l.b16 %v113
    %v393 = vunpack.c.l.b16 %v114
    %v394 = vunpack.c.h.b16 %v114
    %v395 = vunpack.c.l.b16 %v115
    %v396 = vunpack.c.h.b16 %v115
    %v397 = vunpack.c.l.b16 %v116
    %v398 = vunpack.c.h.b16 %v116
    %v399 = vunpack.c.l.b16 %v117
    %v400 = vunpack.c.l.b16 %v118
    %v401 = vunpack.c.h.b16 %v118
    %v402 = vunpack.c.l.b16 %v119
    %v403 = vunpack.c.h.b16 %v119
    %v404 = vunpack.c.l.b16 %v120
    %v405 = vunpack.c.h.b16 %v120
    %v406 = vunpack.c.l.b16 %v121
    %v407 = vunpack.c.l.b16 %v122
    %v408 = vunpack.c.h.b16 %v122
    %v409 = vunpack.c.l.b16 %v123
    %v410 = vunpack.c.h.b16 %v123
    %v411 = vunpack.c.l.b16 %v124
    %v412 = vunpack.c.h.b16 %v124
    %v413 = vunpack.c.l.b16 %v125
    %v414 = vunpack.c.l.b16 %v126
    %v415 = vunpack.c.h.b16 %v126
    %v416 = vunpack.c.l.b16 %v127
    %v417 = vunpack.c.h.b16 %v127
    %v418 = vunpack.c.l.b16 %v128
    %v419 = vunpack.c.h.b16 %v128
    %v420 = vunpack.c.l.b16 %v129
    %v421 = vunpack.c.l.b16 %v130
    %v422 = vunpack.c.h.b16 %v130
    %v423 = vunpack.c.l.b16 %v131
    %v424 = vunpack.c.h.b16 %v131
    %v425 = vunpack.c.l.b16 %v132
    %v426 = vunpack.c.h.b16 %v132
    %v427 = vunpack.c.l.b16 %v133
    %v428 = vunpack.c.l.b16 %v134
    %v429 = vunpack.c.h.b16 %v134
    %v430 = vunpack.c.l.b16 %v135
    %v431 = vunpack.c.h.b16 %v135
    %v432 = vunpack.c.l.b16 %v136
    %v433 = vunpack.c.h.b16 %v136
    %v434 = vunpack.c.l.b16 %v137
    %v435 = vunpack.c.l.b16 %v138
    %v436 = vunpack.c.h.b16 %v138
    %v437 = vunpack.c.l.b16 %v139
    %v438 = vunpack.c.h.b16 %v139
    %v439 = vunpack.c.l.b16 %v140
    %v440 = vunpack.c.h.b16 %v140
    %v441 = vunpack.c.l.b16 %v141
    %v442 = vunpack.c.l.b16 %v142
    %v443 = vunpack.c.h.b16 %v142
    %v444 = vunpack.c.l.b16 %v143
    %v445 = vunpack.c.h.b16 %v143
    %v446 = vunpack.c.l.b16 %v144
    %v447 = vunpack.c.h.b16 %v144
    %v448 = vunpack.c.l.b16 %v145
    %v449 = vunpack.c.l.b16 %v146
    %v450 = vunpack.c.h.b16 %v146
    %v451 = vunpack.c.l.b16 %v147
    %v452 = vunpack.c.h.b16 %v147
    %v453 = vunpack.c.l.b16 %v148
    %v454 = vunpack.c.h.b16 %v148
    %v455 = vunpack.c.l.b16 %v149
    %v456 = vunpack.c.l.b16 %v150
    %v457 = vunpack.c.h.b16 %v150
    %v458 = vunpack.c.l.b16 %v151
    %v459 = vunpack.c.h.b16 %v151
    %v460 = vunpack.c.l.b16 %v152
    %v461 = vunpack.c.h.b16 %v152
    %v462 = vunpack.c.l.b16 %v153
    %v463 = vpack.c.b16 %v358, %v351
    %v464 = vpack.c.b16 %v359, %v352
    %v465 = vpack.c.b16 %v360, %v353
    %v466 = vpack.c.b16 %v361, %v354
    %v467 = vpack.c.b16 %v362, %v355
    %v468 = vpack.c.b16 %v363, %v356
    %v469 = vpack.c.b16 %v364, %v357
    %v470 = vpack.c.b16 %v372, %v365
    %v471 = vpack.c.b16 %v373, %v366
    %v472 = vpack.c.b16 %v374, %v367
    %v473 = vpack.c.b16 %v375, %v368
    %v474 = vpack.c.b16 %v376, %v369
    %v475 = vpack.c.b16 %v377, %v370
    %v476 = vpack.c.b16 %v378, %v371
    %v477 = vpack.c.b16 %v386, %v379
    %v478 = vpack.c.b16 %v387, %v380
    %v479 = vpack.c.b16 %v388, %v381
    %v480 = vpack.c.b16 %v389, %v382
    %v481 = vpack.c.b16 %v390, %v383
    %v482 = vpack.c.b16 %v391, %v384
    %v483 = vpack.c.b16 %v392, %v385
    %v484 = vpack.c.b16 %v400, %v393
    %v485 = vpack.c.b16 %v401, %v394
    %v486 = vpack.c.b16 %v402, %v395
    %v487 = vpack.c.b16 %v403, %v396
    %v488 = vpack.c.b16 %v404, %v397
    %v489 = vpack.c.b16 %v405, %v398
    %v490 = vpack.c.b16 %v406, %v399
    %v491 = vpack.c.b16 %v414, %v407
    %v492 = vpack.c.b16 %v415, %v408
    %v493 = vpack.c.b16 %v416, %v409
    %v494 = vpack.c.b16 %v417, %v410
    %v495 = vpack.c.b16 %v418, %v411
    %v496 = vpack.c.b16 %v419, %v412
    %v497 = vpack.c.b16 %v420, %v413
    %v498 = vpack.c.b16 %v428, %v421
    %v499 = vpack.c.b16 %v429, %v422
    %v500 = vpack.c.b16 %v430, %v423
    %v501 = vpack.c.b16 %v431, %v424
    %v502 = vpack.c.b16 %v432, %v425
    %v503 = vpack.c.b16 %v433, %v426
    %v504 = vpack.c.b16 %v434, %v427
    %v505 = vpack.c.b16 %v442, %v435
    %v506 = vpack.c.b16 %v443, %v436
    %v507 = vpack.c.b16 %v444, %v437
    %v508 = vpack.c.b16 %v445, %v438
    %v509 = vpack.c.b16 %v446, %v439
    %v510 = vpack.c.b16 %v447, %v440
    %v511 = vpack.c.b16 %v448, %v441
    %v512 = vpack.c.b16 %v456, %v449
    %v513 = vpack.c.b16 %v457, %v450
    %v514 = vpack.c.b16 %v458, %v451
    %v515 = vpack.c.b16 %v459, %v452
    %v516 = vpack.c.b16 %v460, %v453
    %v517 = vpack.c.b16 %v461, %v454
    %v518 = vpack.c.b16 %v462, %v455
    %575 = vmatprep.subr.bf16.mxu0 %v513
    %576 = vmatpush1.bf16.msra.mxu0 %v512
    %577 = vmatprep.subr.bf16.mxu0 %v506
    %578 = vmatpush1.bf16.msra.mxu0 %v505
    %579 = vmatprep.subr.bf16.mxu0 %v499
    %580 = vmatpush1.bf16.msra.mxu0 %v498
    %581 = vmatprep.subr.bf16.mxu0 %v492
    %582 = vmatpush1.bf16.msra.mxu0 %v491
    %583 = vmatprep.subr.bf16.mxu0 %v485
    %584 = vmatpush1.bf16.msra.mxu0 %v484
    %585 = vmatprep.subr.bf16.mxu0 %v478
    %586 = vmatpush1.bf16.msra.mxu0 %v477
    %587 = vmatprep.subr.bf16.mxu0 %v471
    %588 = vmatpush1.bf16.msra.mxu0 %v470
    %589 = vmatprep.subr.bf16.mxu0 %v464
    %590 = vmatpush1.bf16.msra.mxu0 %v463
    %591 = vmatprep.subr.bf16.mxu0 0
    %592 = vmatpush2.bf16.msra.mxu0 0
    %593 = vmatprep.subr.bf16.mxu0 0
    %594 = vmatpush2.bf16.msra.mxu0 0
    %595 = vmatprep.subr.bf16.mxu0 0
    %596 = vmatpush2.bf16.msra.mxu0 0
    %597 = vmatprep.subr.bf16.mxu0 0
    %598 = vmatpush2.bf16.msra.mxu0 0
    %599 = vmatprep.subr.bf16.mxu0 0
    %600 = vmatpush2.bf16.msra.mxu0 0
    %601 = vmatprep.subr.bf16.mxu0 0
    %602 = vmatpush2.bf16.msra.mxu0 0
    %603 = vmatprep.subr.bf16.mxu0 0
    %604 = vmatpush2.bf16.msra.mxu0 0
    %605 = vmatprep.subr.bf16.mxu0 0
    %606 = vmatpush2.bf16.msra.mxu0 0
    %607 = vmatprep.mubr.bf16.mxu0 0
    %608 = vmatmul.mubr.bf16.gmra.mxu0 %v255
    %v609 = vpop.f32.mrf.mxu0
    %v610 = vadd.f32 %v159, %v609
    %v611 = vpop.f32.mrf.mxu0
    %v612 = vadd.f32 %v163, %v611
    %v613 = vpop.f32.mrf.mxu0
    %v614 = vadd.f32 %v159, %v613
    %v615 = vpop.f32.mrf.mxu0
    %v616 = vadd.f32 %v163, %v615
    %617 = vmatprep.mubr.bf16.mxu0 0
    %618 = vmatmul.mubr.bf16.gmra.mxu0 %v256
    %v619 = vpop.f32.mrf.mxu0
    %v620 = vadd.f32 %v159, %v619
    %v621 = vpop.f32.mrf.mxu0
    %v622 = vadd.f32 %v163, %v621
    %v623 = vpop.f32.mrf.mxu0
    %v624 = vadd.f32 %v159, %v623
    %v625 = vpop.f32.mrf.mxu0
    %v626 = vadd.f32 %v163, %v625
    %627 = vmatprep.mubr.bf16.mxu0 0
    %628 = vmatmul.mubr.bf16.gmra.mxu0 %v257
    %v629 = vpop.f32.mrf.mxu0
    %v630 = vadd.f32 %v159, %v629
    %v631 = vpop.f32.mrf.mxu0
    %v632 = vadd.f32 %v163, %v631
    %v633 = vpop.f32.mrf.mxu0
    %v634 = vadd.f32 %v159, %v633
    %v635 = vpop.f32.mrf.mxu0
    %v636 = vadd.f32 %v163, %v635
    %637 = vmatprep.mubr.bf16.mxu0 0
    %638 = vmatmul.mubr.bf16.gmra.mxu0 %v258
    %v639 = vpop.f32.mrf.mxu0
    %v640 = vadd.f32 %v159, %v639
    %v641 = vpop.f32.mrf.mxu0
    %v642 = vadd.f32 %v163, %v641
    %v643 = vpop.f32.mrf.mxu0
    %v644 = vadd.f32 %v159, %v643
    %v645 = vpop.f32.mrf.mxu0
    %v646 = vadd.f32 %v163, %v645
    %647 = vmatprep.mubr.bf16.mxu0 0
    %648 = vmatmul.mubr.bf16.gmra.mxu0 %v259
    %v649 = vpop.f32.mrf.mxu0
    %v650 = vadd.f32 %v159, %v649
    %v651 = vpop.f32.mrf.mxu0
    %v652 = vadd.f32 %v163, %v651
    %v653 = vpop.f32.mrf.mxu0
    %v654 = vadd.f32 %v159, %v653
    %v655 = vpop.f32.mrf.mxu0
    %v656 = vadd.f32 %v163, %v655
    %657 = vmatprep.mubr.bf16.mxu0 0
    %658 = vmatmul.mubr.bf16.gmra.mxu0 %v260
    %v659 = vpop.f32.mrf.mxu0
    %v660 = vadd.f32 %v159, %v659
    %v661 = vpop.f32.mrf.mxu0
    %v662 = vadd.f32 %v163, %v661
    %v663 = vpop.f32.mrf.mxu0
    %v664 = vadd.f32 %v159, %v663
    %v665 = vpop.f32.mrf.mxu0
    %v666 = vadd.f32 %v163, %v665
    %667 = vmatprep.mubr.bf16.mxu0 0
    %668 = vmatmul.mubr.bf16.gmra.mxu0 %v261
    %v669 = vpop.f32.mrf.mxu0
    %v670 = vadd.f32 %v159, %v669
    %v671 = vpop.f32.mrf.mxu0
    %v672 = vadd.f32 %v163, %v671
    %v673 = vpop.f32.mrf.mxu0
    %v674 = vadd.f32 %v159, %v673
    %v675 = vpop.f32.mrf.mxu0
    %v676 = vadd.f32 %v163, %v675
    %677 = vmatprep.mubr.bf16.mxu0 0
    %678 = vmatmul.mubr.bf16.gmra.mxu0 %v262
    %v679 = vpop.f32.mrf.mxu0
    %v680 = vadd.f32 %v159, %v679
    %v681 = vpop.f32.mrf.mxu0
    %v682 = vadd.f32 %v163, %v681
    %v683 = vpop.f32.mrf.mxu0
    %v684 = vadd.f32 %v159, %v683
    %v685 = vpop.f32.mrf.mxu0
    %v686 = vadd.f32 %v163, %v685
    %687 = vmatprep.mubr.bf16.mxu0 0
    %688 = vmatmul.mubr.bf16.gmra.mxu0 %v263
    %v689 = vpop.f32.mrf.mxu0
    %v690 = vadd.f32 %v159, %v689
    %v691 = vpop.f32.mrf.mxu0
    %v692 = vadd.f32 %v163, %v691
    %v693 = vpop.f32.mrf.mxu0
    %v694 = vadd.f32 %v159, %v693
    %v695 = vpop.f32.mrf.mxu0
    %v696 = vadd.f32 %v163, %v695
    %697 = vmatprep.mubr.bf16.mxu0 0
    %698 = vmatmul.mubr.bf16.gmra.mxu0 %v264
    %v699 = vpop.f32.mrf.mxu0
    %v700 = vadd.f32 %v159, %v699
    %v701 = vpop.f32.mrf.mxu0
    %v702 = vadd.f32 %v163, %v701
    %v703 = vpop.f32.mrf.mxu0
    %v704 = vadd.f32 %v159, %v703
    %v705 = vpop.f32.mrf.mxu0
    %v706 = vadd.f32 %v163, %v705
    %707 = vmatprep.mubr.bf16.mxu0 0
    %708 = vmatmul.mubr.bf16.gmra.mxu0 %v265
    %v709 = vpop.f32.mrf.mxu0
    %v710 = vadd.f32 %v159, %v709
    %v711 = vpop.f32.mrf.mxu0
    %v712 = vadd.f32 %v163, %v711
    %v713 = vpop.f32.mrf.mxu0
    %v714 = vadd.f32 %v159, %v713
    %v715 = vpop.f32.mrf.mxu0
    %v716 = vadd.f32 %v163, %v715
    %717 = vmatprep.mubr.bf16.mxu0 0
    %718 = vmatmul.mubr.bf16.gmra.mxu0 %v266
    %v719 = vpop.f32.mrf.mxu0
    %v720 = vadd.f32 %v159, %v719
    %v721 = vpop.f32.mrf.mxu0
    %v722 = vadd.f32 %v163, %v721
    %v723 = vpop.f32.mrf.mxu0
    %v724 = vadd.f32 %v159, %v723
    %v725 = vpop.f32.mrf.mxu0
    %v726 = vadd.f32 %v163, %v725
    %727 = vmatprep.mubr.bf16.mxu0 0
    %728 = vmatmul.mubr.bf16.gmra.mxu0 %v267
    %v729 = vpop.f32.mrf.mxu0
    %v730 = vadd.f32 %v159, %v729
    %v731 = vpop.f32.mrf.mxu0
    %v732 = vadd.f32 %v163, %v731
    %v733 = vpop.f32.mrf.mxu0
    %v734 = vadd.f32 %v159, %v733
    %v735 = vpop.f32.mrf.mxu0
    %v736 = vadd.f32 %v163, %v735
    %737 = vmatprep.mubr.bf16.mxu0 0
    %738 = vmatmul.mubr.bf16.gmra.mxu0 %v268
    %v739 = vpop.f32.mrf.mxu0
    %v740 = vadd.f32 %v159, %v739
    %v741 = vpop.f32.mrf.mxu0
    %v742 = vadd.f32 %v163, %v741
    %v743 = vpop.f32.mrf.mxu0
    %v744 = vadd.f32 %v159, %v743
    %v745 = vpop.f32.mrf.mxu0
    %v746 = vadd.f32 %v163, %v745
    %747 = vmatprep.mubr.bf16.mxu0 0
    %748 = vmatmul.mubr.bf16.gmra.mxu0 %v269
    %v749 = vpop.f32.mrf.mxu0
    %v750 = vadd.f32 %v159, %v749
    %v751 = vpop.f32.mrf.mxu0
    %v752 = vadd.f32 %v163, %v751
    %v753 = vpop.f32.mrf.mxu0
    %v754 = vadd.f32 %v159, %v753
    %v755 = vpop.f32.mrf.mxu0
    %v756 = vadd.f32 %v163, %v755
    %757 = vmatprep.mubr.bf16.mxu0 0
    %758 = vmatmul.mubr.bf16.gmra.mxu0 %v270
    %v759 = vpop.f32.mrf.mxu0
    %v760 = vadd.f32 %v159, %v759
    %v761 = vpop.f32.mrf.mxu0
    %v762 = vadd.f32 %v163, %v761
    %v763 = vpop.f32.mrf.mxu0
    %v764 = vadd.f32 %v159, %v763
    %v765 = vpop.f32.mrf.mxu0
    %v766 = vadd.f32 %v163, %v765
    %767 = vdwg.mxu0
    %768 = vmatprep.subr.bf16.mxu0 %v515
    %769 = vmatpush1.bf16.msra.mxu0 %v514
    %770 = vmatprep.subr.bf16.mxu0 %v508
    %771 = vmatpush1.bf16.msra.mxu0 %v507
    %772 = vmatprep.subr.bf16.mxu0 %v501
    %773 = vmatpush1.bf16.msra.mxu0 %v500
    %774 = vmatprep.subr.bf16.mxu0 %v494
    %775 = vmatpush1.bf16.msra.mxu0 %v493
    %776 = vmatprep.subr.bf16.mxu0 %v487
    %777 = vmatpush1.bf16.msra.mxu0 %v486
    %778 = vmatprep.subr.bf16.mxu0 %v480
    %779 = vmatpush1.bf16.msra.mxu0 %v479
    %780 = vmatprep.subr.bf16.mxu0 %v473
    %781 = vmatpush1.bf16.msra.mxu0 %v472
    %782 = vmatprep.subr.bf16.mxu0 %v466
    %783 = vmatpush1.bf16.msra.mxu0 %v465
    %784 = vmatprep.subr.bf16.mxu0 0
    %785 = vmatpush2.bf16.msra.mxu0 0
    %786 = vmatprep.subr.bf16.mxu0 0
    %787 = vmatpush2.bf16.msra.mxu0 0
    %788 = vmatprep.subr.bf16.mxu0 0
    %789 = vmatpush2.bf16.msra.mxu0 0
    %790 = vmatprep.subr.bf16.mxu0 0
    %791 = vmatpush2.bf16.msra.mxu0 0
    %792 = vmatprep.subr.bf16.mxu0 0
    %793 = vmatpush2.bf16.msra.mxu0 0
    %794 = vmatprep.subr.bf16.mxu0 0
    %795 = vmatpush2.bf16.msra.mxu0 0
    %796 = vmatprep.subr.bf16.mxu0 0
    %797 = vmatpush2.bf16.msra.mxu0 0
    %798 = vmatprep.subr.bf16.mxu0 0
    %799 = vmatpush2.bf16.msra.mxu0 0
    %800 = vmatprep.mubr.bf16.mxu0 0
    %801 = vmatmul.mubr.bf16.gmra.mxu0 %v255
    %v802 = vpop.f32.mrf.mxu0
    %v803 = vadd.f32 %v167, %v802
    %v804 = vpop.f32.mrf.mxu0
    %v805 = vadd.f32 %v171, %v804
    %v806 = vpop.f32.mrf.mxu0
    %v807 = vadd.f32 %v167, %v806
    %v808 = vpop.f32.mrf.mxu0
    %v809 = vadd.f32 %v171, %v808
    %810 = vmatprep.mubr.bf16.mxu0 0
    %811 = vmatmul.mubr.bf16.gmra.mxu0 %v256
    %v812 = vpop.f32.mrf.mxu0
    %v813 = vadd.f32 %v167, %v812
    %v814 = vpop.f32.mrf.mxu0
    %v815 = vadd.f32 %v171, %v814
    %v816 = vpop.f32.mrf.mxu0
    %v817 = vadd.f32 %v167, %v816
    %v818 = vpop.f32.mrf.mxu0
    %v819 = vadd.f32 %v171, %v818
    %820 = vmatprep.mubr.bf16.mxu0 0
    %821 = vmatmul.mubr.bf16.gmra.mxu0 %v257
    %v822 = vpop.f32.mrf.mxu0
    %v823 = vadd.f32 %v167, %v822
    %v824 = vpop.f32.mrf.mxu0
    %v825 = vadd.f32 %v171, %v824
    %v826 = vpop.f32.mrf.mxu0
    %v827 = vadd.f32 %v167, %v826
    %v828 = vpop.f32.mrf.mxu0
    %v829 = vadd.f32 %v171, %v828
    %830 = vmatprep.mubr.bf16.mxu0 0
    %831 = vmatmul.mubr.bf16.gmra.mxu0 %v258
    %v832 = vpop.f32.mrf.mxu0
    %v833 = vadd.f32 %v167, %v832
    %v834 = vpop.f32.mrf.mxu0
    %v835 = vadd.f32 %v171, %v834
    %v836 = vpop.f32.mrf.mxu0
    %v837 = vadd.f32 %v167, %v836
    %v838 = vpop.f32.mrf.mxu0
    %v839 = vadd.f32 %v171, %v838
    %840 = vmatprep.mubr.bf16.mxu0 0
    %841 = vmatmul.mubr.bf16.gmra.mxu0 %v259
    %v842 = vpop.f32.mrf.mxu0
    %v843 = vadd.f32 %v167, %v842
    %v844 = vpop.f32.mrf.mxu0
    %v845 = vadd.f32 %v171, %v844
    %v846 = vpop.f32.mrf.mxu0
    %v847 = vadd.f32 %v167, %v846
    %v848 = vpop.f32.mrf.mxu0
    %v849 = vadd.f32 %v171, %v848
    %850 = vmatprep.mubr.bf16.mxu0 0
    %851 = vmatmul.mubr.bf16.gmra.mxu0 %v260
    %v852 = vpop.f32.mrf.mxu0
    %v853 = vadd.f32 %v167, %v852
    %v854 = vpop.f32.mrf.mxu0
    %v855 = vadd.f32 %v171, %v854
    %v856 = vpop.f32.mrf.mxu0
    %v857 = vadd.f32 %v167, %v856
    %v858 = vpop.f32.mrf.mxu0
    %v859 = vadd.f32 %v171, %v858
    %860 = vmatprep.mubr.bf16.mxu0 0
    %861 = vmatmul.mubr.bf16.gmra.mxu0 %v261
    %v862 = vpop.f32.mrf.mxu0
    %v863 = vadd.f32 %v167, %v862
    %v864 = vpop.f32.mrf.mxu0
    %v865 = vadd.f32 %v171, %v864
    %v866 = vpop.f32.mrf.mxu0
    %v867 = vadd.f32 %v167, %v866
    %v868 = vpop.f32.mrf.mxu0
    %v869 = vadd.f32 %v171, %v868
    %870 = vmatprep.mubr.bf16.mxu0 0
    %871 = vmatmul.mubr.bf16.gmra.mxu0 %v262
    %v872 = vpop.f32.mrf.mxu0
    %v873 = vadd.f32 %v167, %v872
    %v874 = vpop.f32.mrf.mxu0
    %v875 = vadd.f32 %v171, %v874
    %v876 = vpop.f32.mrf.mxu0
    %v877 = vadd.f32 %v167, %v876
    %v878 = vpop.f32.mrf.mxu0
    %v879 = vadd.f32 %v171, %v878
    %880 = vmatprep.mubr.bf16.mxu0 0
    %881 = vmatmul.mubr.bf16.gmra.mxu0 %v263
    %v882 = vpop.f32.mrf.mxu0
    %v883 = vadd.f32 %v167, %v882
    %v884 = vpop.f32.mrf.mxu0
    %v885 = vadd.f32 %v171, %v884
    %v886 = vpop.f32.mrf.mxu0
    %v887 = vadd.f32 %v167, %v886
    %v888 = vpop.f32.mrf.mxu0
    %v889 = vadd.f32 %v171, %v888
    %890 = vmatprep.mubr.bf16.mxu0 0
    %891 = vmatmul.mubr.bf16.gmra.mxu0 %v264
    %v892 = vpop.f32.mrf.mxu0
    %v893 = vadd.f32 %v167, %v892
    %v894 = vpop.f32.mrf.mxu0
    %v895 = vadd.f32 %v171, %v894
    %v896 = vpop.f32.mrf.mxu0
    %v897 = vadd.f32 %v167, %v896
    %v898 = vpop.f32.mrf.mxu0
    %v899 = vadd.f32 %v171, %v898
    %900 = vmatprep.mubr.bf16.mxu0 0
    %901 = vmatmul.mubr.bf16.gmra.mxu0 %v265
    %v902 = vpop.f32.mrf.mxu0
    %v903 = vadd.f32 %v167, %v902
    %v904 = vpop.f32.mrf.mxu0
    %v905 = vadd.f32 %v171, %v904
    %v906 = vpop.f32.mrf.mxu0
    %v907 = vadd.f32 %v167, %v906
    %v908 = vpop.f32.mrf.mxu0
    %v909 = vadd.f32 %v171, %v908
    %910 = vmatprep.mubr.bf16.mxu0 0
    %911 = vmatmul.mubr.bf16.gmra.mxu0 %v266
    %v912 = vpop.f32.mrf.mxu0
    %v913 = vadd.f32 %v167, %v912
    %v914 = vpop.f32.mrf.mxu0
    %v915 = vadd.f32 %v171, %v914
    %v916 = vpop.f32.mrf.mxu0
    %v917 = vadd.f32 %v167, %v916
    %v918 = vpop.f32.mrf.mxu0
    %v919 = vadd.f32 %v171, %v918
    %920 = vmatprep.mubr.bf16.mxu0 0
    %921 = vmatmul.mubr.bf16.gmra.mxu0 %v267
    %v922 = vpop.f32.mrf.mxu0
    %v923 = vadd.f32 %v167, %v922
    %v924 = vpop.f32.mrf.mxu0
    %v925 = vadd.f32 %v171, %v924
    %v926 = vpop.f32.mrf.mxu0
    %v927 = vadd.f32 %v167, %v926
    %v928 = vpop.f32.mrf.mxu0
    %v929 = vadd.f32 %v171, %v928
    %930 = vmatprep.mubr.bf16.mxu0 0
    %931 = vmatmul.mubr.bf16.gmra.mxu0 %v268
    %v932 = vpop.f32.mrf.mxu0
    %v933 = vadd.f32 %v167, %v932
    %v934 = vpop.f32.mrf.mxu0
    %v935 = vadd.f32 %v171, %v934
    %v936 = vpop.f32.mrf.mxu0
    %v937 = vadd.f32 %v167, %v936
    %v938 = vpop.f32.mrf.mxu0
    %v939 = vadd.f32 %v171, %v938
    %940 = vmatprep.mubr.bf16.mxu0 0
    %941 = vmatmul.mubr.bf16.gmra.mxu0 %v269
    %v942 = vpop.f32.mrf.mxu0
    %v943 = vadd.f32 %v167, %v942
    %v944 = vpop.f32.mrf.mxu0
    %v945 = vadd.f32 %v171, %v944
    %v946 = vpop.f32.mrf.mxu0
    %v947 = vadd.f32 %v167, %v946
    %v948 = vpop.f32.mrf.mxu0
    %v949 = vadd.f32 %v171, %v948
    %950 = vmatprep.mubr.bf16.mxu0 0
    %951 = vmatmul.mubr.bf16.gmra.mxu0 %v270
    %v952 = vpop.f32.mrf.mxu0
    %v953 = vadd.f32 %v167, %v952
    %v954 = vpop.f32.mrf.mxu0
    %v955 = vadd.f32 %v171, %v954
    %v956 = vpop.f32.mrf.mxu0
    %v957 = vadd.f32 %v167, %v956
    %v958 = vpop.f32.mrf.mxu0
    %v959 = vadd.f32 %v171, %v958
    %960 = vdwg.mxu0
    %961 = vmatprep.subr.bf16.mxu0 %v517
    %962 = vmatpush1.bf16.msra.mxu0 %v516
    %963 = vmatprep.subr.bf16.mxu0 %v510
    %964 = vmatpush1.bf16.msra.mxu0 %v509
    %965 = vmatprep.subr.bf16.mxu0 %v503
    %966 = vmatpush1.bf16.msra.mxu0 %v502
    %967 = vmatprep.subr.bf16.mxu0 %v496
    %968 = vmatpush1.bf16.msra.mxu0 %v495
    %969 = vmatprep.subr.bf16.mxu0 %v489
    %970 = vmatpush1.bf16.msra.mxu0 %v488
    %971 = vmatprep.subr.bf16.mxu0 %v482
    %972 = vmatpush1.bf16.msra.mxu0 %v481
    %973 = vmatprep.subr.bf16.mxu0 %v475
    %974 = vmatpush1.bf16.msra.mxu0 %v474
    %975 = vmatprep.subr.bf16.mxu0 %v468
    %976 = vmatpush1.bf16.msra.mxu0 %v467
    %977 = vmatprep.subr.bf16.mxu0 0
    %978 = vmatpush2.bf16.msra.mxu0 0
    %979 = vmatprep.subr.bf16.mxu0 0
    %980 = vmatpush2.bf16.msra.mxu0 0
    %981 = vmatprep.subr.bf16.mxu0 0
    %982 = vmatpush2.bf16.msra.mxu0 0
    %983 = vmatprep.subr.bf16.mxu0 0
    %984 = vmatpush2.bf16.msra.mxu0 0
    %985 = vmatprep.subr.bf16.mxu0 0
    %986 = vmatpush2.bf16.msra.mxu0 0
    %987 = vmatprep.subr.bf16.mxu0 0
    %988 = vmatpush2.bf16.msra.mxu0 0
    %989 = vmatprep.subr.bf16.mxu0 0
    %990 = vmatpush2.bf16.msra.mxu0 0
    %991 = vmatprep.subr.bf16.mxu0 0
    %992 = vmatpush2.bf16.msra.mxu0 0
    %993 = vmatprep.mubr.bf16.mxu0 0
    %994 = vmatmul.mubr.bf16.gmra.mxu0 %v255
    %v995 = vpop.f32.mrf.mxu0
    %v996 = vadd.f32 %v175, %v995
    %v997 = vpop.f32.mrf.mxu0
    %v998 = vadd.f32 %v179, %v997
    %v999 = vpop.f32.mrf.mxu0
    %v1000 = vadd.f32 %v175, %v999
    %v1001 = vpop.f32.mrf.mxu0
    %v1002 = vadd.f32 %v179, %v1001
    %1003 = vmatprep.mubr.bf16.mxu0 0
    %1004 = vmatmul.mubr.bf16.gmra.mxu0 %v256
    %v1005 = vpop.f32.mrf.mxu0
    %v1006 = vadd.f32 %v175, %v1005
    %v1007 = vpop.f32.mrf.mxu0
    %v1008 = vadd.f32 %v179, %v1007
    %v1009 = vpop.f32.mrf.mxu0
    %v1010 = vadd.f32 %v175, %v1009
    %v1011 = vpop.f32.mrf.mxu0
    %v1012 = vadd.f32 %v179, %v1011
    %1013 = vmatprep.mubr.bf16.mxu0 0
    %1014 = vmatmul.mubr.bf16.gmra.mxu0 %v257
    %v1015 = vpop.f32.mrf.mxu0
    %v1016 = vadd.f32 %v175, %v1015
    %v1017 = vpop.f32.mrf.mxu0
    %v1018 = vadd.f32 %v179, %v1017
    %v1019 = vpop.f32.mrf.mxu0
    %v1020 = vadd.f32 %v175, %v1019
    %v1021 = vpop.f32.mrf.mxu0
    %v1022 = vadd.f32 %v179, %v1021
    %1023 = vmatprep.mubr.bf16.mxu0 0
    %1024 = vmatmul.mubr.bf16.gmra.mxu0 %v258
    %v1025 = vpop.f32.mrf.mxu0
    %v1026 = vadd.f32 %v175, %v1025
    %v1027 = vpop.f32.mrf.mxu0
    %v1028 = vadd.f32 %v179, %v1027
    %v1029 = vpop.f32.mrf.mxu0
    %v1030 = vadd.f32 %v175, %v1029
    %v1031 = vpop.f32.mrf.mxu0
    %v1032 = vadd.f32 %v179, %v1031
    %1033 = vmatprep.mubr.bf16.mxu0 0
    %1034 = vmatmul.mubr.bf16.gmra.mxu0 %v259
    %v1035 = vpop.f32.mrf.mxu0
    %v1036 = vadd.f32 %v175, %v1035
    %v1037 = vpop.f32.mrf.mxu0
    %v1038 = vadd.f32 %v179, %v1037
    %v1039 = vpop.f32.mrf.mxu0
    %v1040 = vadd.f32 %v175, %v1039
    %v1041 = vpop.f32.mrf.mxu0
    %v1042 = vadd.f32 %v179, %v1041
    %1043 = vmatprep.mubr.bf16.mxu0 0
    %1044 = vmatmul.mubr.bf16.gmra.mxu0 %v260
    %v1045 = vpop.f32.mrf.mxu0
    %v1046 = vadd.f32 %v175, %v1045
    %v1047 = vpop.f32.mrf.mxu0
    %v1048 = vadd.f32 %v179, %v1047
    %v1049 = vpop.f32.mrf.mxu0
    %v1050 = vadd.f32 %v175, %v1049
    %v1051 = vpop.f32.mrf.mxu0
    %v1052 = vadd.f32 %v179, %v1051
    %1053 = vmatprep.mubr.bf16.mxu0 0
    %1054 = vmatmul.mubr.bf16.gmra.mxu0 %v261
    %v1055 = vpop.f32.mrf.mxu0
    %v1056 = vadd.f32 %v175, %v1055
    %v1057 = vpop.f32.mrf.mxu0
    %v1058 = vadd.f32 %v179, %v1057
    %v1059 = vpop.f32.mrf.mxu0
    %v1060 = vadd.f32 %v175, %v1059
    %v1061 = vpop.f32.mrf.mxu0
    %v1062 = vadd.f32 %v179, %v1061
    %1063 = vmatprep.mubr.bf16.mxu0 0
    %1064 = vmatmul.mubr.bf16.gmra.mxu0 %v262
    %v1065 = vpop.f32.mrf.mxu0
    %v1066 = vadd.f32 %v175, %v1065
    %v1067 = vpop.f32.mrf.mxu0
    %v1068 = vadd.f32 %v179, %v1067
    %v1069 = vpop.f32.mrf.mxu0
    %v1070 = vadd.f32 %v175, %v1069
    %v1071 = vpop.f32.mrf.mxu0
    %v1072 = vadd.f32 %v179, %v1071
    %1073 = vmatprep.mubr.bf16.mxu0 0
    %1074 = vmatmul.mubr.bf16.gmra.mxu0 %v263
    %v1075 = vpop.f32.mrf.mxu0
    %v1076 = vadd.f32 %v175, %v1075
    %v1077 = vpop.f32.mrf.mxu0
    %v1078 = vadd.f32 %v179, %v1077
    %v1079 = vpop.f32.mrf.mxu0
    %v1080 = vadd.f32 %v175, %v1079
    %v1081 = vpop.f32.mrf.mxu0
    %v1082 = vadd.f32 %v179, %v1081
    %1083 = vmatprep.mubr.bf16.mxu0 0
    %1084 = vmatmul.mubr.bf16.gmra.mxu0 %v264
    %v1085 = vpop.f32.mrf.mxu0
    %v1086 = vadd.f32 %v175, %v1085
    %v1087 = vpop.f32.mrf.mxu0
    %v1088 = vadd.f32 %v179, %v1087
    %v1089 = vpop.f32.mrf.mxu0
    %v1090 = vadd.f32 %v175, %v1089
    %v1091 = vpop.f32.mrf.mxu0
    %v1092 = vadd.f32 %v179, %v1091
    %1093 = vmatprep.mubr.bf16.mxu0 0
    %1094 = vmatmul.mubr.bf16.gmra.mxu0 %v265
    %v1095 = vpop.f32.mrf.mxu0
    %v1096 = vadd.f32 %v175, %v1095
    %v1097 = vpop.f32.mrf.mxu0
    %v1098 = vadd.f32 %v179, %v1097
    %v1099 = vpop.f32.mrf.mxu0
    %v1100 = vadd.f32 %v175, %v1099
    %v1101 = vpop.f32.mrf.mxu0
    %v1102 = vadd.f32 %v179, %v1101
    %1103 = vmatprep.mubr.bf16.mxu0 0
    %1104 = vmatmul.mubr.bf16.gmra.mxu0 %v266
    %v1105 = vpop.f32.mrf.mxu0
    %v1106 = vadd.f32 %v175, %v1105
    %v1107 = vpop.f32.mrf.mxu0
    %v1108 = vadd.f32 %v179, %v1107
    %v1109 = vpop.f32.mrf.mxu0
    %v1110 = vadd.f32 %v175, %v1109
    %v1111 = vpop.f32.mrf.mxu0
    %v1112 = vadd.f32 %v179, %v1111
    %1113 = vmatprep.mubr.bf16.mxu0 0
    %1114 = vmatmul.mubr.bf16.gmra.mxu0 %v267
    %v1115 = vpop.f32.mrf.mxu0
    %v1116 = vadd.f32 %v175, %v1115
    %v1117 = vpop.f32.mrf.mxu0
    %v1118 = vadd.f32 %v179, %v1117
    %v1119 = vpop.f32.mrf.mxu0
    %v1120 = vadd.f32 %v175, %v1119
    %v1121 = vpop.f32.mrf.mxu0
    %v1122 = vadd.f32 %v179, %v1121
    %1123 = vmatprep.mubr.bf16.mxu0 0
    %1124 = vmatmul.mubr.bf16.gmra.mxu0 %v268
    %v1125 = vpop.f32.mrf.mxu0
    %v1126 = vadd.f32 %v175, %v1125
    %v1127 = vpop.f32.mrf.mxu0
    %v1128 = vadd.f32 %v179, %v1127
    %v1129 = vpop.f32.mrf.mxu0
    %v1130 = vadd.f32 %v175, %v1129
    %v1131 = vpop.f32.mrf.mxu0
    %v1132 = vadd.f32 %v179, %v1131
    %1133 = vmatprep.mubr.bf16.mxu0 0
    %1134 = vmatmul.mubr.bf16.gmra.mxu0 %v269
    %v1135 = vpop.f32.mrf.mxu0
    %v1136 = vadd.f32 %v175, %v1135
    %v1137 = vpop.f32.mrf.mxu0
    %v1138 = vadd.f32 %v179, %v1137
    %v1139 = vpop.f32.mrf.mxu0
    %v1140 = vadd.f32 %v175, %v1139
    %v1141 = vpop.f32.mrf.mxu0
    %v1142 = vadd.f32 %v179, %v1141
    %1143 = vmatprep.mubr.bf16.mxu0 0
    %1144 = vmatmul.mubr.bf16.gmra.mxu0 %v270
    %v1145 = vpop.f32.mrf.mxu0
    %v1146 = vadd.f32 %v175, %v1145
    %v1147 = vpop.f32.mrf.mxu0
    %v1148 = vadd.f32 %v179, %v1147
    %v1149 = vpop.f32.mrf.mxu0
    %v1150 = vadd.f32 %v175, %v1149
    %v1151 = vpop.f32.mrf.mxu0
    %v1152 = vadd.f32 %v179, %v1151
    %1153 = vdwg.mxu0
    %1154 = vmatprep.subr.bf16.mxu0 0
    %1155 = vmatpush1.bf16.msra.mxu0 %v518
    %1156 = vmatprep.subr.bf16.mxu0 0
    %1157 = vmatpush1.bf16.msra.mxu0 %v511
    %1158 = vmatprep.subr.bf16.mxu0 0
    %1159 = vmatpush1.bf16.msra.mxu0 %v504
    %1160 = vmatprep.subr.bf16.mxu0 0
    %1161 = vmatpush1.bf16.msra.mxu0 %v497
    %1162 = vmatprep.subr.bf16.mxu0 0
    %1163 = vmatpush1.bf16.msra.mxu0 %v490
    %1164 = vmatprep.subr.bf16.mxu0 0
    %1165 = vmatpush1.bf16.msra.mxu0 %v483
    %1166 = vmatprep.subr.bf16.mxu0 0
    %1167 = vmatpush1.bf16.msra.mxu0 %v476
    %1168 = vmatprep.subr.bf16.mxu0 0
    %1169 = vmatpush1.bf16.msra.mxu0 %v469
    %1170 = vmatprep.subr.bf16.mxu0 0
    %1171 = vmatpush2.bf16.msra.mxu0 0
    %1172 = vmatprep.subr.bf16.mxu0 0
    %1173 = vmatpush2.bf16.msra.mxu0 0
    %1174 = vmatprep.subr.bf16.mxu0 0
    %1175 = vmatpush2.bf16.msra.mxu0 0
    %1176 = vmatprep.subr.bf16.mxu0 0
    %1177 = vmatpush2.bf16.msra.mxu0 0
    %1178 = vmatprep.subr.bf16.mxu0 0
    %1179 = vmatpush2.bf16.msra.mxu0 0
    %1180 = vmatprep.subr.bf16.mxu0 0
    %1181 = vmatpush2.bf16.msra.mxu0 0
    %1182 = vmatprep.subr.bf16.mxu0 0
    %1183 = vmatpush2.bf16.msra.mxu0 0
    %1184 = vmatprep.subr.bf16.mxu0 0
    %1185 = vmatpush2.bf16.msra.mxu0 0
    %1186 = vmatprep.mubr.bf16.mxu0 0
    %1187 = vmatmul.mubr.bf16.gmra.mxu0 %v255
    %v1188 = vpop.f32.mrf.mxu0
    %v1189 = vadd.f32 %v183, %v1188
    %v1190 = vpop.f32.mrf.mxu0
    %v1191 = vpop.f32.mrf.mxu0
    %v1192 = vadd.f32 %v183, %v1191
    %v1193 = vpop.f32.mrf.mxu0
    %1194 = vmatprep.mubr.bf16.mxu0 0
    %1195 = vmatmul.mubr.bf16.gmra.mxu0 %v256
    %v1196 = vpop.f32.mrf.mxu0
    %v1197 = vadd.f32 %v183, %v1196
    %v1198 = vpop.f32.mrf.mxu0
    %v1199 = vpop.f32.mrf.mxu0
    %v1200 = vadd.f32 %v183, %v1199
    %v1201 = vpop.f32.mrf.mxu0
    %1202 = vmatprep.mubr.bf16.mxu0 0
    %1203 = vmatmul.mubr.bf16.gmra.mxu0 %v257
    %v1204 = vpop.f32.mrf.mxu0
    %v1205 = vadd.f32 %v183, %v1204
    %v1206 = vpop.f32.mrf.mxu0
    %v1207 = vpop.f32.mrf.mxu0
    %v1208 = vadd.f32 %v183, %v1207
    %v1209 = vpop.f32.mrf.mxu0
    %1210 = vmatprep.mubr.bf16.mxu0 0
    %1211 = vmatmul.mubr.bf16.gmra.mxu0 %v258
    %v1212 = vpop.f32.mrf.mxu0
    %v1213 = vadd.f32 %v183, %v1212
    %v1214 = vpop.f32.mrf.mxu0
    %v1215 = vpop.f32.mrf.mxu0
    %v1216 = vadd.f32 %v183, %v1215
    %v1217 = vpop.f32.mrf.mxu0
    %1218 = vmatprep.mubr.bf16.mxu0 0
    %1219 = vmatmul.mubr.bf16.gmra.mxu0 %v259
    %v1220 = vpop.f32.mrf.mxu0
    %v1221 = vadd.f32 %v183, %v1220
    %v1222 = vpop.f32.mrf.mxu0
    %v1223 = vpop.f32.mrf.mxu0
    %v1224 = vadd.f32 %v183, %v1223
    %v1225 = vpop.f32.mrf.mxu0
    %1226 = vmatprep.mubr.bf16.mxu0 0
    %1227 = vmatmul.mubr.bf16.gmra.mxu0 %v260
    %v1228 = vpop.f32.mrf.mxu0
    %v1229 = vadd.f32 %v183, %v1228
    %v1230 = vpop.f32.mrf.mxu0
    %v1231 = vpop.f32.mrf.mxu0
    %v1232 = vadd.f32 %v183, %v1231
    %v1233 = vpop.f32.mrf.mxu0
    %1234 = vmatprep.mubr.bf16.mxu0 0
    %1235 = vmatmul.mubr.bf16.gmra.mxu0 %v261
    %v1236 = vpop.f32.mrf.mxu0
    %v1237 = vadd.f32 %v183, %v1236
    %v1238 = vpop.f32.mrf.mxu0
    %v1239 = vpop.f32.mrf.mxu0
    %v1240 = vadd.f32 %v183, %v1239
    %v1241 = vpop.f32.mrf.mxu0
    %1242 = vmatprep.mubr.bf16.mxu0 0
    %1243 = vmatmul.mubr.bf16.gmra.mxu0 %v262
    %v1244 = vpop.f32.mrf.mxu0
    %v1245 = vadd.f32 %v183, %v1244
    %v1246 = vpop.f32.mrf.mxu0
    %v1247 = vpop.f32.mrf.mxu0
    %v1248 = vadd.f32 %v183, %v1247
    %v1249 = vpop.f32.mrf.mxu0
    %1250 = vmatprep.mubr.bf16.mxu0 0
    %1251 = vmatmul.mubr.bf16.gmra.mxu0 %v263
    %v1252 = vpop.f32.mrf.mxu0
    %v1253 = vadd.f32 %v183, %v1252
    %v1254 = vpop.f32.mrf.mxu0
    %v1255 = vpop.f32.mrf.mxu0
    %v1256 = vadd.f32 %v183, %v1255
    %v1257 = vpop.f32.mrf.mxu0
    %1258 = vmatprep.mubr.bf16.mxu0 0
    %1259 = vmatmul.mubr.bf16.gmra.mxu0 %v264
    %v1260 = vpop.f32.mrf.mxu0
    %v1261 = vadd.f32 %v183, %v1260
    %v1262 = vpop.f32.mrf.mxu0
    %v1263 = vpop.f32.mrf.mxu0
    %v1264 = vadd.f32 %v183, %v1263
    %v1265 = vpop.f32.mrf.mxu0
    %1266 = vmatprep.mubr.bf16.mxu0 0
    %1267 = vmatmul.mubr.bf16.gmra.mxu0 %v265
    %v1268 = vpop.f32.mrf.mxu0
    %v1269 = vadd.f32 %v183, %v1268
    %v1270 = vpop.f32.mrf.mxu0
    %v1271 = vpop.f32.mrf.mxu0
    %v1272 = vadd.f32 %v183, %v1271
    %v1273 = vpop.f32.mrf.mxu0
    %1274 = vmatprep.mubr.bf16.mxu0 0
    %1275 = vmatmul.mubr.bf16.gmra.mxu0 %v266
    %v1276 = vpop.f32.mrf.mxu0
    %v1277 = vadd.f32 %v183, %v1276
    %v1278 = vpop.f32.mrf.mxu0
    %v1279 = vpop.f32.mrf.mxu0
    %v1280 = vadd.f32 %v183, %v1279
    %v1281 = vpop.f32.mrf.mxu0
    %1282 = vmatprep.mubr.bf16.mxu0 0
    %1283 = vmatmul.mubr.bf16.gmra.mxu0 %v267
    %v1284 = vpop.f32.mrf.mxu0
    %v1285 = vadd.f32 %v183, %v1284
    %v1286 = vpop.f32.mrf.mxu0
    %v1287 = vpop.f32.mrf.mxu0
    %v1288 = vadd.f32 %v183, %v1287
    %v1289 = vpop.f32.mrf.mxu0
    %1290 = vmatprep.mubr.bf16.mxu0 0
    %1291 = vmatmul.mubr.bf16.gmra.mxu0 %v268
    %v1292 = vpop.f32.mrf.mxu0
    %v1293 = vadd.f32 %v183, %v1292
    %v1294 = vpop.f32.mrf.mxu0
    %v1295 = vpop.f32.mrf.mxu0
    %v1296 = vadd.f32 %v183, %v1295
    %v1297 = vpop.f32.mrf.mxu0
    %1298 = vmatprep.mubr.bf16.mxu0 0
    %1299 = vmatmul.mubr.bf16.gmra.mxu0 %v269
    %v1300 = vpop.f32.mrf.mxu0
    %v1301 = vadd.f32 %v183, %v1300
    %v1302 = vpop.f32.mrf.mxu0
    %v1303 = vpop.f32.mrf.mxu0
    %v1304 = vadd.f32 %v183, %v1303
    %v1305 = vpop.f32.mrf.mxu0
    %1306 = vmatprep.mubr.bf16.mxu0 0
    %1307 = vmatmul.mubr.bf16.gmra.mxu0 %v270
    %v1308 = vpop.f32.mrf.mxu0
    %v1309 = vadd.f32 %v183, %v1308
    %v1310 = vpop.f32.mrf.mxu0
    %v1311 = vpop.f32.mrf.mxu0
    %v1312 = vadd.f32 %v183, %v1311
    %v1313 = vpop.f32.mrf.mxu0
    %1314 = vdwg.mxu0
    %v1315 = vtanh.pop %v610
    %v1316 = vtanh.pop %v612
    %v1317 = vtanh.pop %v803
    %v1318 = vtanh.pop %v805
    %v1319 = vtanh.pop %v996
    %v1320 = vtanh.pop %v998
    %v1321 = vtanh.pop %v1189
    %v1322 = vtanh.pop %v614
    %v1323 = vtanh.pop %v616
    %v1324 = vtanh.pop %v807
    %v1325 = vtanh.pop %v809
    %v1326 = vtanh.pop %v1000
    %v1327 = vtanh.pop %v1002
    %v1328 = vtanh.pop %v1192
    %v1329 = vtanh.pop %v620
    %v1330 = vtanh.pop %v622
    %v1331 = vtanh.pop %v813
    %v1332 = vtanh.pop %v815
    %v1333 = vtanh.pop %v1006
    %v1334 = vtanh.pop %v1008
    %v1335 = vtanh.pop %v1197
    %v1336 = vtanh.pop %v624
    %v1337 = vtanh.pop %v626
    %v1338 = vtanh.pop %v817
    %v1339 = vtanh.pop %v819
    %v1340 = vtanh.pop %v1010
    %v1341 = vtanh.pop %v1012
    %v1342 = vtanh.pop %v1200
    %v1343 = vtanh.pop %v630
    %v1344 = vtanh.pop %v632
    %v1345 = vtanh.pop %v823
    %v1346 = vtanh.pop %v825
    %v1347 = vtanh.pop %v1016
    %v1348 = vtanh.pop %v1018
    %v1349 = vtanh.pop %v1205
    %v1350 = vtanh.pop %v634
    %v1351 = vtanh.pop %v636
    %v1352 = vtanh.pop %v827
    %v1353 = vtanh.pop %v829
    %v1354 = vtanh.pop %v1020
    %v1355 = vtanh.pop %v1022
    %v1356 = vtanh.pop %v1208
    %v1357 = vtanh.pop %v640
    %v1358 = vtanh.pop %v642
    %v1359 = vtanh.pop %v833
    %v1360 = vtanh.pop %v835
    %v1361 = vtanh.pop %v1026
    %v1362 = vtanh.pop %v1028
    %v1363 = vtanh.pop %v1213
    %v1364 = vtanh.pop %v644
    %v1365 = vtanh.pop %v646
    %v1366 = vtanh.pop %v837
    %v1367 = vtanh.pop %v839
    %v1368 = vtanh.pop %v1030
    %v1369 = vtanh.pop %v1032
    %v1370 = vtanh.pop %v1216
    %v1371 = vtanh.pop %v650
    %v1372 = vtanh.pop %v652
    %v1373 = vtanh.pop %v843
    %v1374 = vtanh.pop %v845
    %v1375 = vtanh.pop %v1036
    %v1376 = vtanh.pop %v1038
    %v1377 = vtanh.pop %v1221
    %v1378 = vtanh.pop %v654
    %v1379 = vtanh.pop %v656
    %v1380 = vtanh.pop %v847
    %v1381 = vtanh.pop %v849
    %v1382 = vtanh.pop %v1040
    %v1383 = vtanh.pop %v1042
    %v1384 = vtanh.pop %v1224
    %v1385 = vtanh.pop %v660
    %v1386 = vtanh.pop %v662
    %v1387 = vtanh.pop %v853
    %v1388 = vtanh.pop %v855
    %v1389 = vtanh.pop %v1046
    %v1390 = vtanh.pop %v1048
    %v1391 = vtanh.pop %v1229
    %v1392 = vtanh.pop %v664
    %v1393 = vtanh.pop %v666
    %v1394 = vtanh.pop %v857
    %v1395 = vtanh.pop %v859
    %v1396 = vtanh.pop %v1050
    %v1397 = vtanh.pop %v1052
    %v1398 = vtanh.pop %v1232
    %v1399 = vtanh.pop %v670
    %v1400 = vtanh.pop %v672
    %v1401 = vtanh.pop %v863
    %v1402 = vtanh.pop %v865
    %v1403 = vtanh.pop %v1056
    %v1404 = vtanh.pop %v1058
    %v1405 = vtanh.pop %v1237
    %v1406 = vtanh.pop %v674
    %v1407 = vtanh.pop %v676
    %v1408 = vtanh.pop %v867
    %v1409 = vtanh.pop %v869
    %v1410 = vtanh.pop %v1060
    %v1411 = vtanh.pop %v1062
    %v1412 = vtanh.pop %v1240
    %v1413 = vtanh.pop %v680
    %v1414 = vtanh.pop %v682
    %v1415 = vtanh.pop %v873
    %v1416 = vtanh.pop %v875
    %v1417 = vtanh.pop %v1066
    %v1418 = vtanh.pop %v1068
    %v1419 = vtanh.pop %v1245
    %v1420 = vtanh.pop %v684
    %v1421 = vtanh.pop %v686
    %v1422 = vtanh.pop %v877
    %v1423 = vtanh.pop %v879
    %v1424 = vtanh.pop %v1070
    %v1425 = vtanh.pop %v1072
    %v1426 = vtanh.pop %v1248
    %v1427 = vtanh.pop %v690
    %v1428 = vtanh.pop %v692
    %v1429 = vtanh.pop %v883
    %v1430 = vtanh.pop %v885
    %v1431 = vtanh.pop %v1076
    %v1432 = vtanh.pop %v1078
    %v1433 = vtanh.pop %v1253
    %v1434 = vtanh.pop %v694
    %v1435 = vtanh.pop %v696
    %v1436 = vtanh.pop %v887
    %v1437 = vtanh.pop %v889
    %v1438 = vtanh.pop %v1080
    %v1439 = vtanh.pop %v1082
    %v1440 = vtanh.pop %v1256
    %v1441 = vtanh.pop %v700
    %v1442 = vtanh.pop %v702
    %v1443 = vtanh.pop %v893
    %v1444 = vtanh.pop %v895
    %v1445 = vtanh.pop %v1086
    %v1446 = vtanh.pop %v1088
    %v1447 = vtanh.pop %v1261
    %v1448 = vtanh.pop %v704
    %v1449 = vtanh.pop %v706
    %v1450 = vtanh.pop %v897
    %v1451 = vtanh.pop %v899
    %v1452 = vtanh.pop %v1090
    %v1453 = vtanh.pop %v1092
    %v1454 = vtanh.pop %v1264
    %v1455 = vtanh.pop %v710
    %v1456 = vtanh.pop %v712
    %v1457 = vtanh.pop %v903
    %v1458 = vtanh.pop %v905
    %v1459 = vtanh.pop %v1096
    %v1460 = vtanh.pop %v1098
    %v1461 = vtanh.pop %v1269
    %v1462 = vtanh.pop %v714
    %v1463 = vtanh.pop %v716
    %v1464 = vtanh.pop %v907
    %v1465 = vtanh.pop %v909
    %v1466 = vtanh.pop %v1100
    %v1467 = vtanh.pop %v1102
    %v1468 = vtanh.pop %v1272
    %v1469 = vtanh.pop %v720
    %v1470 = vtanh.pop %v722
    %v1471 = vtanh.pop %v913
    %v1472 = vtanh.pop %v915
    %v1473 = vtanh.pop %v1106
    %v1474 = vtanh.pop %v1108
    %v1475 = vtanh.pop %v1277
    %v1476 = vtanh.pop %v724
    %v1477 = vtanh.pop %v726
    %v1478 = vtanh.pop %v917
    %v1479 = vtanh.pop %v919
    %v1480 = vtanh.pop %v1110
    %v1481 = vtanh.pop %v1112
    %v1482 = vtanh.pop %v1280
    %v1483 = vtanh.pop %v730
    %v1484 = vtanh.pop %v732
    %v1485 = vtanh.pop %v923
    %v1486 = vtanh.pop %v925
    %v1487 = vtanh.pop %v1116
    %v1488 = vtanh.pop %v1118
    %v1489 = vtanh.pop %v1285
    %v1490 = vtanh.pop %v734
    %v1491 = vtanh.pop %v736
    %v1492 = vtanh.pop %v927
    %v1493 = vtanh.pop %v929
    %v1494 = vtanh.pop %v1120
    %v1495 = vtanh.pop %v1122
    %v1496 = vtanh.pop %v1288
    %v1497 = vtanh.pop %v740
    %v1498 = vtanh.pop %v742
    %v1499 = vtanh.pop %v933
    %v1500 = vtanh.pop %v935
    %v1501 = vtanh.pop %v1126
    %v1502 = vtanh.pop %v1128
    %v1503 = vtanh.pop %v1293
    %v1504 = vtanh.pop %v744
    %v1505 = vtanh.pop %v746
    %v1506 = vtanh.pop %v937
    %v1507 = vtanh.pop %v939
    %v1508 = vtanh.pop %v1130
    %v1509 = vtanh.pop %v1132
    %v1510 = vtanh.pop %v1296
    %v1511 = vtanh.pop %v750
    %v1512 = vtanh.pop %v752
    %v1513 = vtanh.pop %v943
    %v1514 = vtanh.pop %v945
    %v1515 = vtanh.pop %v1136
    %v1516 = vtanh.pop %v1138
    %v1517 = vtanh.pop %v1301
    %v1518 = vtanh.pop %v754
    %v1519 = vtanh.pop %v756
    %v1520 = vtanh.pop %v947
    %v1521 = vtanh.pop %v949
    %v1522 = vtanh.pop %v1140
    %v1523 = vtanh.pop %v1142
    %v1524 = vtanh.pop %v1304
    %v1525 = vtanh.pop %v760
    %v1526 = vtanh.pop %v762
    %v1527 = vtanh.pop %v953
    %v1528 = vtanh.pop %v955
    %v1529 = vtanh.pop %v1146
    %v1530 = vtanh.pop %v1148
    %v1531 = vtanh.pop %v1309
    %v1532 = vtanh.pop %v764
    %v1533 = vtanh.pop %v766
    %v1534 = vtanh.pop %v957
    %v1535 = vtanh.pop %v959
    %v1536 = vtanh.pop %v1150
    %v1537 = vtanh.pop %v1152
    %v1538 = vtanh.pop %v1312
    %v1539 = vmax.f32 %v1315, %v1316
    %v1540 = vmax.f32 %v1322, %v1323
    %v1541 = vmax.f32 %v1329, %v1330
    %v1542 = vmax.f32 %v1336, %v1337
    %v1543 = vmax.f32 %v1343, %v1344
    %v1544 = vmax.f32 %v1350, %v1351
    %v1545 = vmax.f32 %v1357, %v1358
    %v1546 = vmax.f32 %v1364, %v1365
    %v1547 = vmax.f32 %v1371, %v1372
    %v1548 = vmax.f32 %v1378, %v1379
    %v1549 = vmax.f32 %v1385, %v1386
    %v1550 = vmax.f32 %v1392, %v1393
    %v1551 = vmax.f32 %v1399, %v1400
    %v1552 = vmax.f32 %v1406, %v1407
    %v1553 = vmax.f32 %v1413, %v1414
    %v1554 = vmax.f32 %v1420, %v1421
    %v1555 = vmax.f32 %v1427, %v1428
    %v1556 = vmax.f32 %v1434, %v1435
    %v1557 = vmax.f32 %v1441, %v1442
    %v1558 = vmax.f32 %v1448, %v1449
    %v1559 = vmax.f32 %v1455, %v1456
    %v1560 = vmax.f32 %v1462, %v1463
    %v1561 = vmax.f32 %v1469, %v1470
    %v1562 = vmax.f32 %v1476, %v1477
    %v1563 = vmax.f32 %v1483, %v1484
    %v1564 = vmax.f32 %v1490, %v1491
    %v1565 = vmax.f32 %v1497, %v1498
    %v1566 = vmax.f32 %v1504, %v1505
    %v1567 = vmax.f32 %v1511, %v1512
    %v1568 = vmax.f32 %v1518, %v1519
    %v1569 = vmax.f32 %v1525, %v1526
    %v1570 = vmax.f32 %v1532, %v1533
    %v1571 = vmax.f32 %v1539, %v1317
    %v1572 = vmax.f32 %v1540, %v1324
    %v1573 = vmax.f32 %v1541, %v1331
    %v1574 = vmax.f32 %v1542, %v1338
    %v1575 = vmax.f32 %v1543, %v1345
    %v1576 = vmax.f32 %v1544, %v1352
    %v1577 = vmax.f32 %v1545, %v1359
    %v1578 = vmax.f32 %v1546, %v1366
    %v1579 = vmax.f32 %v1547, %v1373
    %v1580 = vmax.f32 %v1548, %v1380
    %v1581 = vmax.f32 %v1549, %v1387
    %v1582 = vmax.f32 %v1550, %v1394
    %v1583 = vmax.f32 %v1551, %v1401
    %v1584 = vmax.f32 %v1552, %v1408
    %v1585 = vmax.f32 %v1553, %v1415
    %v1586 = vmax.f32 %v1554, %v1422
    %v1587 = vmax.f32 %v1555, %v1429
    %v1588 = vmax.f32 %v1556, %v1436
    %v1589 = vmax.f32 %v1557, %v1443
    %v1590 = vmax.f32 %v1558, %v1450
    %v1591 = vmax.f32 %v1559, %v1457
    %v1592 = vmax.f32 %v1560, %v1464
    %v1593 = vmax.f32 %v1561, %v1471
    %v1594 = vmax.f32 %v1562, %v1478
    %v1595 = vmax.f32 %v1563, %v1485
    %v1596 = vmax.f32 %v1564, %v1492
    %v1597 = vmax.f32 %v1565, %v1499
    %v1598 = vmax.f32 %v1566, %v1506
    %v1599 = vmax.f32 %v1567, %v1513
    %v1600 = vmax.f32 %v1568, %v1520
    %v1601 = vmax.f32 %v1569, %v1527
    %v1602 = vmax.f32 %v1570, %v1534
    %v1603 = vmax.f32 %v1571, %v1318
    %v1604 = vmax.f32 %v1572, %v1325
    %v1605 = vmax.f32 %v1573, %v1332
    %v1606 = vmax.f32 %v1574, %v1339
    %v1607 = vmax.f32 %v1575, %v1346
    %v1608 = vmax.f32 %v1576, %v1353
    %v1609 = vmax.f32 %v1577, %v1360
    %v1610 = vmax.f32 %v1578, %v1367
    %v1611 = vmax.f32 %v1579, %v1374
    %v1612 = vmax.f32 %v1580, %v1381
    %v1613 = vmax.f32 %v1581, %v1388
    %v1614 = vmax.f32 %v1582, %v1395
    %v1615 = vmax.f32 %v1583, %v1402
    %v1616 = vmax.f32 %v1584, %v1409
    %v1617 = vmax.f32 %v1585, %v1416
    %v1618 = vmax.f32 %v1586, %v1423
    %v1619 = vmax.f32 %v1587, %v1430
    %v1620 = vmax.f32 %v1588, %v1437
    %v1621 = vmax.f32 %v1589, %v1444
    %v1622 = vmax.f32 %v1590, %v1451
    %v1623 = vmax.f32 %v1591, %v1458
    %v1624 = vmax.f32 %v1592, %v1465
    %v1625 = vmax.f32 %v1593, %v1472
    %v1626 = vmax.f32 %v1594, %v1479
    %v1627 = vmax.f32 %v1595, %v1486
    %v1628 = vmax.f32 %v1596, %v1493
    %v1629 = vmax.f32 %v1597, %v1500
    %v1630 = vmax.f32 %v1598, %v1507
    %v1631 = vmax.f32 %v1599, %v1514
    %v1632 = vmax.f32 %v1600, %v1521
    %v1633 = vmax.f32 %v1601, %v1528
    %v1634 = vmax.f32 %v1602, %v1535
    %v1635 = vmax.f32 %v1603, %v1319
    %v1636 = vmax.f32 %v1604, %v1326
    %v1637 = vmax.f32 %v1605, %v1333
    %v1638 = vmax.f32 %v1606, %v1340
    %v1639 = vmax.f32 %v1607, %v1347
    %v1640 = vmax.f32 %v1608, %v1354
    %v1641 = vmax.f32 %v1609, %v1361
    %v1642 = vmax.f32 %v1610, %v1368
    %v1643 = vmax.f32 %v1611, %v1375
    %v1644 = vmax.f32 %v1612, %v1382
    %v1645 = vmax.f32 %v1613, %v1389
    %v1646 = vmax.f32 %v1614, %v1396
    %v1647 = vmax.f32 %v1615, %v1403
    %v1648 = vmax.f32 %v1616, %v1410
    %v1649 = vmax.f32 %v1617, %v1417
    %v1650 = vmax.f32 %v1618, %v1424
    %v1651 = vmax.f32 %v1619, %v1431
    %v1652 = vmax.f32 %v1620, %v1438
    %v1653 = vmax.f32 %v1621, %v1445
    %v1654 = vmax.f32 %v1622, %v1452
    %v1655 = vmax.f32 %v1623, %v1459
    %v1656 = vmax.f32 %v1624, %v1466
    %v1657 = vmax.f32 %v1625, %v1473
    %v1658 = vmax.f32 %v1626, %v1480
    %v1659 = vmax.f32 %v1627, %v1487
    %v1660 = vmax.f32 %v1628, %v1494
    %v1661 = vmax.f32 %v1629, %v1501
    %v1662 = vmax.f32 %v1630, %v1508
    %v1663 = vmax.f32 %v1631, %v1515
    %v1664 = vmax.f32 %v1632, %v1522
    %v1665 = vmax.f32 %v1633, %v1529
    %v1666 = vmax.f32 %v1634, %v1536
    %v1667 = vmax.f32 %v1635, %v1320
    %v1668 = vmax.f32 %v1636, %v1327
    %v1669 = vmax.f32 %v1637, %v1334
    %v1670 = vmax.f32 %v1638, %v1341
    %v1671 = vmax.f32 %v1639, %v1348
    %v1672 = vmax.f32 %v1640, %v1355
    %v1673 = vmax.f32 %v1641, %v1362
    %v1674 = vmax.f32 %v1642, %v1369
    %v1675 = vmax.f32 %v1643, %v1376
    %v1676 = vmax.f32 %v1644, %v1383
    %v1677 = vmax.f32 %v1645, %v1390
    %v1678 = vmax.f32 %v1646, %v1397
    %v1679 = vmax.f32 %v1647, %v1404
    %v1680 = vmax.f32 %v1648, %v1411
    %v1681 = vmax.f32 %v1649, %v1418
    %v1682 = vmax.f32 %v1650, %v1425
    %v1683 = vmax.f32 %v1651, %v1432
    %v1684 = vmax.f32 %v1652, %v1439
    %v1685 = vmax.f32 %v1653, %v1446
    %v1686 = vmax.f32 %v1654, %v1453
    %v1687 = vmax.f32 %v1655, %v1460
    %v1688 = vmax.f32 %v1656, %v1467
    %v1689 = vmax.f32 %v1657, %v1474
    %v1690 = vmax.f32 %v1658, %v1481
    %v1691 = vmax.f32 %v1659, %v1488
    %v1692 = vmax.f32 %v1660, %v1495
    %v1693 = vmax.f32 %v1661, %v1502
    %v1694 = vmax.f32 %v1662, %v1509
    %v1695 = vmax.f32 %v1663, %v1516
    %v1696 = vmax.f32 %v1664, %v1523
    %v1697 = vmax.f32 %v1665, %v1530
    %v1698 = vmax.f32 %v1666, %v1537
    %v1699 = vmax.f32 %v1667, %v1321
    %v1700 = vmax.f32 %v1668, %v1328
    %v1701 = vmax.f32 %v1669, %v1335
    %v1702 = vmax.f32 %v1670, %v1342
    %v1703 = vmax.f32 %v1671, %v1349
    %v1704 = vmax.f32 %v1672, %v1356
    %v1705 = vmax.f32 %v1673, %v1363
    %v1706 = vmax.f32 %v1674, %v1370
    %v1707 = vmax.f32 %v1675, %v1377
    %v1708 = vmax.f32 %v1676, %v1384
    %v1709 = vmax.f32 %v1677, %v1391
    %v1710 = vmax.f32 %v1678, %v1398
    %v1711 = vmax.f32 %v1679, %v1405
    %v1712 = vmax.f32 %v1680, %v1412
    %v1713 = vmax.f32 %v1681, %v1419
    %v1714 = vmax.f32 %v1682, %v1426
    %v1715 = vmax.f32 %v1683, %v1433
    %v1716 = vmax.f32 %v1684, %v1440
    %v1717 = vmax.f32 %v1685, %v1447
    %v1718 = vmax.f32 %v1686, %v1454
    %v1719 = vmax.f32 %v1687, %v1461
    %v1720 = vmax.f32 %v1688, %v1468
    %v1721 = vmax.f32 %v1689, %v1475
    %v1722 = vmax.f32 %v1690, %v1482
    %v1723 = vmax.f32 %v1691, %v1489
    %v1724 = vmax.f32 %v1692, %v1496
    %v1725 = vmax.f32 %v1693, %v1503
    %v1726 = vmax.f32 %v1694, %v1510
    %v1727 = vmax.f32 %v1695, %v1517
    %v1728 = vmax.f32 %v1696, %v1524
    %v1729 = vmax.f32 %v1697, %v1531
    %v1730 = vmax.f32 %v1698, %v1538
    %1731 = vst [vmem:[#allocation8] sm:$0xff] %v1699
    %1732 = vst [vmem:[#allocation8 + $0x8] sm:$0xff] %v1700
    %1733 = vst [vmem:[#allocation8 + $0x10] sm:$0xff] %v1701
    %1734 = vst [vmem:[#allocation8 + $0x18] sm:$0xff] %v1702
    %1735 = vst [vmem:[#allocation8 + $0x20] sm:$0xff] %v1703
    %1736 = vst [vmem:[#allocation8 + $0x28] sm:$0xff] %v1704
    %1737 = vst [vmem:[#allocation8 + $0x30] sm:$0xff] %v1705
    %1738 = vst [vmem:[#allocation8 + $0x38] sm:$0xff] %v1706
    %1739 = vst [vmem:[#allocation8 + $0x40] sm:$0xff] %v1707
    %1740 = vst [vmem:[#allocation8 + $0x48] sm:$0xff] %v1708
    %1741 = vst [vmem:[#allocation8 + $0x50] sm:$0xff] %v1709
    %1742 = vst [vmem:[#allocation8 + $0x58] sm:$0xff] %v1710
    %1743 = vst [vmem:[#allocation8 + $0x60] sm:$0xff] %v1711
    %1744 = vst [vmem:[#allocation8 + $0x68] sm:$0xff] %v1712
    %1745 = vst [vmem:[#allocation8 + $0x70] sm:$0xff] %v1713
    %1746 = vst [vmem:[#allocation8 + $0x78] sm:$0xff] %v1714
    %1747 = vst [vmem:[#allocation8 + $0x80] sm:$0xff] %v1715
    %1748 = vst [vmem:[#allocation8 + $0x88] sm:$0xff] %v1716
    %1749 = vst [vmem:[#allocation8 + $0x90] sm:$0xff] %v1717
    %1750 = vst [vmem:[#allocation8 + $0x98] sm:$0xff] %v1718
    %1751 = vst [vmem:[#allocation8 + $0xa0] sm:$0xff] %v1719
    %1752 = vst [vmem:[#allocation8 + $0xa8] sm:$0xff] %v1720
    %1753 = vst [vmem:[#allocation8 + $0xb0] sm:$0xff] %v1721
    %1754 = vst [vmem:[#allocation8 + $0xb8] sm:$0xff] %v1722
    %1755 = vst [vmem:[#allocation8 + $0xc0] sm:$0xff] %v1723
    %1756 = vst [vmem:[#allocation8 + $0xc8] sm:$0xff] %v1724
    %1757 = vst [vmem:[#allocation8 + $0xd0] sm:$0xff] %v1725
    %1758 = vst [vmem:[#allocation8 + $0xd8] sm:$0xff] %v1726
    %1759 = vst [vmem:[#allocation8 + $0xe0] sm:$0xff] %v1727
    %1760 = vst [vmem:[#allocation8 + $0xe8] sm:$0xff] %v1728
    %1761 = vst [vmem:[#allocation8 + $0xf0] sm:$0xff] %v1729
    %1762 = vst [vmem:[#allocation8 + $0xf8] sm:$0xff] %v1730
    %s1763 = smul.u32 0, 256
    %v1764 = vlaneseq
    %v1765 = vshrl.u32 %v1764, 7
    %v1766 = vadd.s32 %v1765, 8
    %v1767 = vadd.s32 %v1765, 16
    %v1768 = vadd.s32 %v1765, 24
    %v1769 = vadd.s32 %v1765, 32
    %v1770 = vadd.s32 %v1765, 40
    %v1771 = vadd.s32 %v1765, 48
    %v1772 = vadd.s32 %v1765, 56
    %v1773 = vadd.s32 %v1765, 64
    %v1774 = vadd.s32 %v1765, 72
    %v1775 = vadd.s32 %v1765, 80
    %v1776 = vadd.s32 %v1765, 88
    %v1777 = vadd.s32 %v1765, 96
    %v1778 = vadd.s32 %v1765, 104
    %v1779 = vadd.s32 %v1765, 112
    %v1780 = vadd.s32 %v1765, 120
    %v1781 = vadd.s32 %v1765, 128
    %v1782 = vadd.s32 %v1765, 136
    %v1783 = vadd.s32 %v1765, 144
    %v1784 = vadd.s32 %v1765, 152
    %v1785 = vadd.s32 %v1765, 160
    %v1786 = vadd.s32 %v1765, 168
    %v1787 = vadd.s32 %v1765, 176
    %v1788 = vadd.s32 %v1765, 184
    %v1789 = vadd.s32 %v1765, 192
    %v1790 = vadd.s32 %v1765, 200
    %v1791 = vadd.s32 %v1765, 208
    %v1792 = vadd.s32 %v1765, 216
    %v1793 = vadd.s32 %v1765, 224
    %v1794 = vadd.s32 %v1765, 232
    %v1795 = vadd.s32 %v1765, 240
    %v1796 = vadd.s32 %v1765, 248
    %v1797 = vstv %s1763
    %v1798 = vadd.s32 %v1797, %v1765
    %v1799 = vadd.s32 %v1797, %v1766
    %v1800 = vadd.s32 %v1797, %v1767
    %v1801 = vadd.s32 %v1797, %v1768
    %v1802 = vadd.s32 %v1797, %v1769
    %v1803 = vadd.s32 %v1797, %v1770
    %v1804 = vadd.s32 %v1797, %v1771
    %v1805 = vadd.s32 %v1797, %v1772
    %v1806 = vadd.s32 %v1797, %v1773
    %v1807 = vadd.s32 %v1797, %v1774
    %v1808 = vadd.s32 %v1797, %v1775
    %v1809 = vadd.s32 %v1797, %v1776
    %v1810 = vadd.s32 %v1797, %v1777
    %v1811 = vadd.s32 %v1797, %v1778
    %v1812 = vadd.s32 %v1797, %v1779
    %v1813 = vadd.s32 %v1797, %v1780
    %v1814 = vadd.s32 %v1797, %v1781
    %v1815 = vadd.s32 %v1797, %v1782
    %v1816 = vadd.s32 %v1797, %v1783
    %v1817 = vadd.s32 %v1797, %v1784
    %v1818 = vadd.s32 %v1797, %v1785
    %v1819 = vadd.s32 %v1797, %v1786
    %v1820 = vadd.s32 %v1797, %v1787
    %v1821 = vadd.s32 %v1797, %v1788
    %v1822 = vadd.s32 %v1797, %v1789
    %v1823 = vadd.s32 %v1797, %v1790
    %v1824 = vadd.s32 %v1797, %v1791
    %v1825 = vadd.s32 %v1797, %v1792
    %v1826 = vadd.s32 %v1797, %v1793
    %v1827 = vadd.s32 %v1797, %v1794
    %v1828 = vadd.s32 %v1797, %v1795
    %v1829 = vadd.s32 %v1797, %v1796
    %vm1830 = vcmp.lt.s32.totalorder %v1798, 16
    %vm1831 = vcmp.lt.s32.totalorder %v1799, 16
    %vm1832 = vcmp.lt.s32.totalorder %v1800, 16
    %vm1833 = vcmp.lt.s32.totalorder %v1801, 16
    %vm1834 = vcmp.lt.s32.totalorder %v1802, 16
    %vm1835 = vcmp.lt.s32.totalorder %v1803, 16
    %vm1836 = vcmp.lt.s32.totalorder %v1804, 16
    %vm1837 = vcmp.lt.s32.totalorder %v1805, 16
    %vm1838 = vcmp.lt.s32.totalorder %v1806, 16
    %vm1839 = vcmp.lt.s32.totalorder %v1807, 16
    %vm1840 = vcmp.lt.s32.totalorder %v1808, 16
    %vm1841 = vcmp.lt.s32.totalorder %v1809, 16
    %vm1842 = vcmp.lt.s32.totalorder %v1810, 16
    %vm1843 = vcmp.lt.s32.totalorder %v1811, 16
    %vm1844 = vcmp.lt.s32.totalorder %v1812, 16
    %vm1845 = vcmp.lt.s32.totalorder %v1813, 16
    %vm1846 = vcmp.lt.s32.totalorder %v1814, 16
    %vm1847 = vcmp.lt.s32.totalorder %v1815, 16
    %vm1848 = vcmp.lt.s32.totalorder %v1816, 16
    %vm1849 = vcmp.lt.s32.totalorder %v1817, 16
    %vm1850 = vcmp.lt.s32.totalorder %v1818, 16
    %vm1851 = vcmp.lt.s32.totalorder %v1819, 16
    %vm1852 = vcmp.lt.s32.totalorder %v1820, 16
    %vm1853 = vcmp.lt.s32.totalorder %v1821, 16
    %vm1854 = vcmp.lt.s32.totalorder %v1822, 16
    %vm1855 = vcmp.lt.s32.totalorder %v1823, 16
    %vm1856 = vcmp.lt.s32.totalorder %v1824, 16
    %vm1857 = vcmp.lt.s32.totalorder %v1825, 16
    %vm1858 = vcmp.lt.s32.totalorder %v1826, 16
    %vm1859 = vcmp.lt.s32.totalorder %v1827, 16
    %vm1860 = vcmp.lt.s32.totalorder %v1828, 16
    %vm1861 = vcmp.lt.s32.totalorder %v1829, 16
    %v1862 = vsel %vm1830, 1, 0
    %v1863 = vsel %vm1831, 1, 0
    %v1864 = vsel %vm1832, 1, 0
    %v1865 = vsel %vm1833, 1, 0
    %v1866 = vsel %vm1834, 1, 0
    %v1867 = vsel %vm1835, 1, 0
    %v1868 = vsel %vm1836, 1, 0
    %v1869 = vsel %vm1837, 1, 0
    %v1870 = vsel %vm1838, 1, 0
    %v1871 = vsel %vm1839, 1, 0
    %v1872 = vsel %vm1840, 1, 0
    %v1873 = vsel %vm1841, 1, 0
    %v1874 = vsel %vm1842, 1, 0
    %v1875 = vsel %vm1843, 1, 0
    %v1876 = vsel %vm1844, 1, 0
    %v1877 = vsel %vm1845, 1, 0
    %v1878 = vsel %vm1846, 1, 0
    %v1879 = vsel %vm1847, 1, 0
    %v1880 = vsel %vm1848, 1, 0
    %v1881 = vsel %vm1849, 1, 0
    %v1882 = vsel %vm1850, 1, 0
    %v1883 = vsel %vm1851, 1, 0
    %v1884 = vsel %vm1852, 1, 0
    %v1885 = vsel %vm1853, 1, 0
    %v1886 = vsel %vm1854, 1, 0
    %v1887 = vsel %vm1855, 1, 0
    %v1888 = vsel %vm1856, 1, 0
    %v1889 = vsel %vm1857, 1, 0
    %v1890 = vsel %vm1858, 1, 0
    %v1891 = vsel %vm1859, 1, 0
    %v1892 = vsel %vm1860, 1, 0
    %v1893 = vsel %vm1861, 1, 0
    %vm1894 = vcmp.eq.s32.totalorder %v1862, 1
    %vm1895 = vcmp.eq.s32.totalorder %v1863, 1
    %vm1896 = vcmp.eq.s32.totalorder %v1864, 1
    %vm1897 = vcmp.eq.s32.totalorder %v1865, 1
    %vm1898 = vcmp.eq.s32.totalorder %v1866, 1
    %vm1899 = vcmp.eq.s32.totalorder %v1867, 1
    %vm1900 = vcmp.eq.s32.totalorder %v1868, 1
    %vm1901 = vcmp.eq.s32.totalorder %v1869, 1
    %vm1902 = vcmp.eq.s32.totalorder %v1870, 1
    %vm1903 = vcmp.eq.s32.totalorder %v1871, 1
    %vm1904 = vcmp.eq.s32.totalorder %v1872, 1
    %vm1905 = vcmp.eq.s32.totalorder %v1873, 1
    %vm1906 = vcmp.eq.s32.totalorder %v1874, 1
    %vm1907 = vcmp.eq.s32.totalorder %v1875, 1
    %vm1908 = vcmp.eq.s32.totalorder %v1876, 1
    %vm1909 = vcmp.eq.s32.totalorder %v1877, 1
    %vm1910 = vcmp.eq.s32.totalorder %v1878, 1
    %vm1911 = vcmp.eq.s32.totalorder %v1879, 1
    %vm1912 = vcmp.eq.s32.totalorder %v1880, 1
    %vm1913 = vcmp.eq.s32.totalorder %v1881, 1
    %vm1914 = vcmp.eq.s32.totalorder %v1882, 1
    %vm1915 = vcmp.eq.s32.totalorder %v1883, 1
    %vm1916 = vcmp.eq.s32.totalorder %v1884, 1
    %vm1917 = vcmp.eq.s32.totalorder %v1885, 1
    %vm1918 = vcmp.eq.s32.totalorder %v1886, 1
    %vm1919 = vcmp.eq.s32.totalorder %v1887, 1
    %vm1920 = vcmp.eq.s32.totalorder %v1888, 1
    %vm1921 = vcmp.eq.s32.totalorder %v1889, 1
    %vm1922 = vcmp.eq.s32.totalorder %v1890, 1
    %vm1923 = vcmp.eq.s32.totalorder %v1891, 1
    %vm1924 = vcmp.eq.s32.totalorder %v1892, 1
    %vm1925 = vcmp.eq.s32.totalorder %v1893, 1
    %v1926 = vsel %vm1894, %v1699, 0.0
    %v1927 = vsel %vm1895, %v1700, 0.0
    %v1928 = vsel %vm1896, %v1701, 0.0
    %v1929 = vsel %vm1897, %v1702, 0.0
    %v1930 = vsel %vm1898, %v1703, 0.0
    %v1931 = vsel %vm1899, %v1704, 0.0
    %v1932 = vsel %vm1900, %v1705, 0.0
    %v1933 = vsel %vm1901, %v1706, 0.0
    %v1934 = vsel %vm1902, %v1707, 0.0
    %v1935 = vsel %vm1903, %v1708, 0.0
    %v1936 = vsel %vm1904, %v1709, 0.0
    %v1937 = vsel %vm1905, %v1710, 0.0
    %v1938 = vsel %vm1906, %v1711, 0.0
    %v1939 = vsel %vm1907, %v1712, 0.0
    %v1940 = vsel %vm1908, %v1713, 0.0
    %v1941 = vsel %vm1909, %v1714, 0.0
    %v1942 = vsel %vm1910, %v1715, 0.0
    %v1943 = vsel %vm1911, %v1716, 0.0
    %v1944 = vsel %vm1912, %v1717, 0.0
    %v1945 = vsel %vm1913, %v1718, 0.0
    %v1946 = vsel %vm1914, %v1719, 0.0
    %v1947 = vsel %vm1915, %v1720, 0.0
    %v1948 = vsel %vm1916, %v1721, 0.0
    %v1949 = vsel %vm1917, %v1722, 0.0
    %v1950 = vsel %vm1918, %v1723, 0.0
    %v1951 = vsel %vm1919, %v1724, 0.0
    %v1952 = vsel %vm1920, %v1725, 0.0
    %v1953 = vsel %vm1921, %v1726, 0.0
    %v1954 = vsel %vm1922, %v1727, 0.0
    %v1955 = vsel %vm1923, %v1728, 0.0
    %v1956 = vsel %vm1924, %v1729, 0.0
    %v1957 = vsel %vm1925, %v1730, 0.0
    %v1958 = vadd.f32 %v1926, %v1927
    %v1959 = vadd.f32 %v1958, %v1928
    %v1960 = vadd.f32 %v1959, %v1929
    %v1961 = vadd.f32 %v1960, %v1930
    %v1962 = vadd.f32 %v1961, %v1931
    %v1963 = vadd.f32 %v1962, %v1932
    %v1964 = vadd.f32 %v1963, %v1933
    %v1965 = vadd.f32 %v1964, %v1934
    %v1966 = vadd.f32 %v1965, %v1935
    %v1967 = vadd.f32 %v1966, %v1936
    %v1968 = vadd.f32 %v1967, %v1937
    %v1969 = vadd.f32 %v1968, %v1938
    %v1970 = vadd.f32 %v1969, %v1939
    %v1971 = vadd.f32 %v1970, %v1940
    %v1972 = vadd.f32 %v1971, %v1941
    %v1973 = vadd.f32 %v1972, %v1942
    %v1974 = vadd.f32 %v1973, %v1943
    %v1975 = vadd.f32 %v1974, %v1944
    %v1976 = vadd.f32 %v1975, %v1945
    %v1977 = vadd.f32 %v1976, %v1946
    %v1978 = vadd.f32 %v1977, %v1947
    %v1979 = vadd.f32 %v1978, %v1948
    %v1980 = vadd.f32 %v1979, %v1949
    %v1981 = vadd.f32 %v1980, %v1950
    %v1982 = vadd.f32 %v1981, %v1951
    %v1983 = vadd.f32 %v1982, %v1952
    %v1984 = vadd.f32 %v1983, %v1953
    %v1985 = vadd.f32 %v1984, %v1954
    %v1986 = vadd.f32 %v1985, %v1955
    %v1987 = vadd.f32 %v1986, %v1956
    %v1988 = vadd.f32 %v1987, %v1957
    %v1989 = vrot.slane %v1988, 4
    %v1990 = vadd.f32 %v1988, %v1989
    %v1991 = vrot.slane %v1990, 2
    %v1992 = vadd.f32 %v1990, %v1991
    %v1993 = vrot.slane %v1992, 1
    %v1994 = vadd.f32 %v1992, %v1993
    %v1995 = vmul.f32 %v1926, %v1926
    %v1996 = vmul.f32 %v1927, %v1927
    %v1997 = vmul.f32 %v1928, %v1928
    %v1998 = vmul.f32 %v1929, %v1929
    %v1999 = vmul.f32 %v1930, %v1930
    %v2000 = vmul.f32 %v1931, %v1931
    %v2001 = vmul.f32 %v1932, %v1932
    %v2002 = vmul.f32 %v1933, %v1933
    %v2003 = vmul.f32 %v1934, %v1934
    %v2004 = vmul.f32 %v1935, %v1935
    %v2005 = vmul.f32 %v1936, %v1936
    %v2006 = vmul.f32 %v1937, %v1937
    %v2007 = vmul.f32 %v1938, %v1938
    %v2008 = vmul.f32 %v1939, %v1939
    %v2009 = vmul.f32 %v1940, %v1940
    %v2010 = vmul.f32 %v1941, %v1941
    %v2011 = vmul.f32 %v1942, %v1942
    %v2012 = vmul.f32 %v1943, %v1943
    %v2013 = vmul.f32 %v1944, %v1944
    %v2014 = vmul.f32 %v1945, %v1945
    %v2015 = vmul.f32 %v1946, %v1946
    %v2016 = vmul.f32 %v1947, %v1947
    %v2017 = vmul.f32 %v1948, %v1948
    %v2018 = vmul.f32 %v1949, %v1949
    %v2019 = vmul.f32 %v1950, %v1950
    %v2020 = vmul.f32 %v1951, %v1951
    %v2021 = vmul.f32 %v1952, %v1952
    %v2022 = vmul.f32 %v1953, %v1953
    %v2023 = vmul.f32 %v1954, %v1954
    %v2024 = vmul.f32 %v1955, %v1955
    %v2025 = vmul.f32 %v1956, %v1956
    %v2026 = vmul.f32 %v1957, %v1957
    %v2027 = vadd.f32 %v1995, %v1996
    %v2028 = vadd.f32 %v2027, %v1997
    %v2029 = vadd.f32 %v2028, %v1998
    %v2030 = vadd.f32 %v2029, %v1999
    %v2031 = vadd.f32 %v2030, %v2000
    %v2032 = vadd.f32 %v2031, %v2001
    %v2033 = vadd.f32 %v2032, %v2002
    %v2034 = vadd.f32 %v2033, %v2003
    %v2035 = vadd.f32 %v2034, %v2004
    %v2036 = vadd.f32 %v2035, %v2005
    %v2037 = vadd.f32 %v2036, %v2006
    %v2038 = vadd.f32 %v2037, %v2007
    %v2039 = vadd.f32 %v2038, %v2008
    %v2040 = vadd.f32 %v2039, %v2009
    %v2041 = vadd.f32 %v2040, %v2010
    %v2042 = vadd.f32 %v2041, %v2011
    %v2043 = vadd.f32 %v2042, %v2012
    %v2044 = vadd.f32 %v2043, %v2013
    %v2045 = vadd.f32 %v2044, %v2014
    %v2046 = vadd.f32 %v2045, %v2015
    %v2047 = vadd.f32 %v2046, %v2016
    %v2048 = vadd.f32 %v2047, %v2017
    %v2049 = vadd.f32 %v2048, %v2018
    %v2050 = vadd.f32 %v2049, %v2019
    %v2051 = vadd.f32 %v2050, %v2020
    %v2052 = vadd.f32 %v2051, %v2021
    %v2053 = vadd.f32 %v2052, %v2022
    %v2054 = vadd.f32 %v2053, %v2023
    %v2055 = vadd.f32 %v2054, %v2024
    %v2056 = vadd.f32 %v2055, %v2025
    %v2057 = vadd.f32 %v2056, %v2026
    %v2058 = vrot.slane %v2057, 4
    %v2059 = vadd.f32 %v2057, %v2058
    %v2060 = vrot.slane %v2059, 2
    %v2061 = vadd.f32 %v2059, %v2060
    %v2062 = vrot.slane %v2061, 1
    %v2063 = vadd.f32 %v2061, %v2062
    %vm2064 = vcmask 1040384
    %v2065 = vsel %vm2064, %v1994, %v2063
    %vm2066 = vcmask 1041408
    %v2067 = vsel %vm2066, %v2065, 0.0
    %2068 = vst [vmem:[#allocation9] sm:$0xff] %v2067
    // Predicated region
    $region26: #{tpu_custom_call.1} parent=1 // pred_check
      _
    $region27: #{tpu_custom_call.1} parent=1 // pred_check_branch
      %2070 = sbr.rel (0) target = $region29
    $region28: #{tpu_custom_call.1} parent=1 // pred_region
      %s2072 = ssub.s32 4096, 4096
      %2073 = vsyncadd [#allocation4], %s2072
      %s2074 = sshll.u32 [#allocation8], 4
      %s2075 = int_to_ptr.vmem [resolvable:$true] %s2074
      %2080 = dma.vmem_to_hbm [thread:$0]  %s2075, 4096, %s3, [#allocation4], 128, 128, 8
    $region29: #{tpu_custom_call.1} parent=1 // pred_fallthru
      _
    // Predicated region
    $region30: #{tpu_custom_call.1} parent=1 // pred_check
      _
    $region31: #{tpu_custom_call.1} parent=1 // pred_check_branch
      %2082 = sbr.rel (0) target = $region33
    $region32: #{tpu_custom_call.1} parent=1 // pred_region
      %s2084 = ssub.s32 128, 128
      %2085 = vsyncadd [#allocation10], %s2084
      %s2087 = sshll.u32 [#allocation9], 4
      %s2088 = int_to_ptr.vmem [resolvable:$true] %s2087
      %2090 = dma.vmem_to_hbm [thread:$0]  %s2088, 128, %s4, [#allocation10]
    $region33: #{tpu_custom_call.1} parent=1 // pred_fallthru
      _
    // Predicated region
    $region34: #{tpu_custom_call.1} parent=1 // pred_check
      _
    $region35: #{tpu_custom_call.1} parent=1 // pred_check_branch
      %2092 = sbr.rel (0) target = $region37
    $region36: #{tpu_custom_call.1} parent=1 // pred_region
      %2093 = dma.done [#allocation4], 4096
    $region37: #{tpu_custom_call.1} parent=1 // pred_fallthru
      _
    // Predicated region
    $region38: #{tpu_custom_call.1} parent=1 // pred_check
      _
    $region39: #{tpu_custom_call.1} parent=1 // pred_check_branch
      %2095 = sbr.rel (0) target = $region41
    $region40: #{tpu_custom_call.1} parent=1 // pred_region
      %2096 = dma.done [#allocation10], 128
    $region41: #{tpu_custom_call.1} parent=1 // pred_fallthru
      _
    %2097 = vsyncpa [#allocation3], 1
    %2098 = vsyncpa [#allocation6], 1
    %2099 = vsyncpa [#allocation4], 1
    %2100 = vsyncpa [#allocation10], 1

</llo_original>
